<compile_context>
chip_gen: v5e
topology: v5e:2x2
jax: 0.10.0
libtpu: 0.0.40
codegen_flags: <defaults>
</compile_context>

<pallas_src>
import jax
import jax.numpy as jnp
from jax.experimental import pallas as pl
from jax.experimental.pallas import tpu as pltpu


def _round_up(x, m):
    return ((x + m - 1) // m) * m


# ----------------------------------------------------------------------------
# Kernel
# ----------------------------------------------------------------------------
def se_classifier_kernel(x_ref, w1_ref, b1_ref,
                         ws1_ref, bs1_ref, ws2_ref, bs2_ref,
                         w2_ref, b2_ref, o_ref):
    # x arrives f32 and is cast to bf16 in VMEM (cheaper than an extra
    # HBM cast pass outside the kernel).  All dots accumulate in f32 on the
    # MXU; all elementwise math stays f32.
    x = x_ref[...].astype(jnp.bfloat16)

    # fc1 + ReLU
    h = jnp.dot(x, w1_ref[...], preferred_element_type=jnp.float32) + b1_ref[...]
    h = jnp.maximum(h, 0.0)

    # SE branch: Linear -> ReLU -> Linear -> Sigmoid (all dims padded to 128)
    z = jnp.dot(h.astype(jnp.bfloat16), ws1_ref[...],
                preferred_element_type=jnp.float32) + bs1_ref[...]
    z = jnp.maximum(z, 0.0)
    g = jnp.dot(z.astype(jnp.bfloat16), ws2_ref[...],
                preferred_element_type=jnp.float32) + bs2_ref[...]
    # sigmoid via exp (EUP) + approximate reciprocal (EUP) -> off the VALU
    g = pl.reciprocal(1.0 + jnp.exp(-g), approx=True)

    # channel re-weighting; dropout(p=0.5) is identity in eval mode.
    h = h * g

    # fc2 into a lane-dense (C padded to 128) output slab
    out = jnp.dot(h.astype(jnp.bfloat16), w2_ref[...],
                  preferred_element_type=jnp.float32) + b2_ref[...]
    o_ref[...] = out.astype(o_ref.dtype)


# ----------------------------------------------------------------------------
# One-time parameter preparation (hoisted out of the per-call forward)
# ----------------------------------------------------------------------------
def prepare_params(params):
    """Zero-pad H/R/C to multiples of 128 and cast weights to bf16, once."""
    (w1, b1, ws1, bs1, ws2, bs2, w2, b2) = params
    D, H = w1.shape
    R = ws1.shape[1]
    C = w2.shape[1]
    H_pad = _round_up(H, 128)
    R_pad = _round_up(R, 128)
    C_pad = _round_up(C, 128)

    def pad2(a, rows, cols, dtype):
        a = jnp.asarray(a).reshape((-1, a.shape[-1]))
        out = jnp.zeros((rows, cols), dtype)
        return out.at[:a.shape[0], :a.shape[1]].set(a.astype(dtype))

    weights = (
        pad2(w1, D, H_pad, jnp.bfloat16),      # w1
        pad2(b1, 1, H_pad, jnp.float32),       # b1
        pad2(ws1, H_pad, R_pad, jnp.bfloat16),  # ws1
        pad2(bs1, 1, R_pad, jnp.float32),       # bs1
        pad2(ws2, R_pad, H_pad, jnp.bfloat16),  # ws2
        pad2(bs2, 1, H_pad, jnp.float32),       # bs2
        pad2(w2, H_pad, C_pad, jnp.bfloat16),   # w2
        pad2(b2, 1, C_pad, jnp.float32),        # b2
    )
    return {"weights": weights, "dims": (D, H, R, C, H_pad, R_pad, C_pad)}


# ----------------------------------------------------------------------------
# VMEM budget / tile sizing (generation aware)
# ----------------------------------------------------------------------------
def _vmem_budget_bytes():
    try:
        cap = int(pltpu.get_tpu_info().vmem_capacity_bytes)
    except Exception:
        cap = 64 << 20  # conservative default (v7x physical per-TC VMEM)
    # leave ~25% headroom for compiler scratch / semaphores / spills
    return int(cap * 3 // 4)


def _pick_tile_b(B, D, H_pad, R_pad, C_pad, resident_bytes, budget_bytes):
    # per-row VMEM estimate: double-buffered f32 x tile + double-buffered f32
    # output tile + f32 intermediates (h, gate, squeeze, out) + bf16 copies.
    per_row = (2 * D * 4
               + 2 * C_pad * 4
               + 4 * (2 * H_pad + R_pad + C_pad)
               + 2 * (2 * H_pad + R_pad)
               + 256)
    per_row = int(per_row * 1.25)  # fudge factor
    avail = budget_bytes - resident_bytes
    if avail <= per_row * 16:
        # Resident weights nearly fill the budget.
        # TODO(synk): switch to an H-tiled streaming kernel in this regime.
        avail = max(budget_bytes // 4, per_row * 16)
    tile_b = min(1024, avail // per_row)
    tile_b = max(16, (tile_b // 16) * 16)
    # keep >= 2 grid steps so v7x's two TensorCores both get work
    if B > 16:
        tile_b = min(tile_b, _round_up(-(-B // 2), 16))
    return max(16, tile_b)


# ----------------------------------------------------------------------------
# Forward
# ----------------------------------------------------------------------------
def se_classifier_forward(x, prepared, *, tile_b=None):
    weights = prepared["weights"]
    D, H, R, C, H_pad, R_pad, C_pad = prepared["dims"]
    B = x.shape[0]
    assert x.shape[1] == D

    resident_bytes = sum(int(w.size) * w.dtype.itemsize for w in weights)
    budget = _vmem_budget_bytes()

    if tile_b is None:
        tile_b = _pick_tile_b(B, D, H_pad, R_pad, C_pad, resident_bytes, budget)
    tile_b = max(16, _round_up(tile_b, 16))

    grid = (pl.cdiv(B, tile_b),)
    rows = grid[0] * tile_b

    flops = 2 * rows * (D * H_pad + H_pad * R_pad + R_pad * H_pad + H_pad * C_pad)
    transcendentals = 2 * rows * H_pad  # exp + approx reciprocal in the gate
    bytes_accessed = (B * D * 4 + resident_bytes + B * C_pad * 4)

    def build_call(buffered_weights):
        if buffered_weights:
            # invariant blocks: fetched once, single-buffered -> half the
            # resident-weight VMEM vs the default double buffering.
            fix = lambda arr: pl.BlockSpec(arr.shape, lambda i: (0, 0),
                                           pipeline_mode=pl.Buffered(1))
        else:
            fix = lambda arr: pl.BlockSpec(arr.shape, lambda i: (0, 0))
        in_specs = ([pl.BlockSpec((tile_b, D), lambda i: (i, 0))]
                    + [fix(w) for w in weights])
        out_specs = pl.BlockSpec((tile_b, C_pad), lambda i: (i, 0))
        return pl.pallas_call(
            se_classifier_kernel,
            out_shape=jax.ShapeDtypeStruct((B, C_pad), jnp.float32),
            grid=grid,
            in_specs=in_specs,
            out_specs=out_specs,
            compiler_params=pltpu.CompilerParams(
                dimension_semantics=("parallel",),  # shard batch grid over TCs
                vmem_limit_bytes=budget),
            cost_estimate=pl.CostEstimate(
                flops=flops,
                transcendentals=transcendentals,
                bytes_accessed=bytes_accessed),
        )

    try:
        out = build_call(True)(x, *weights)
    except Exception:
        # Fallback for JAX versions that reject pipeline_mode=pl.Buffered(1).
        out = build_call(False)(x, *weights)

    return out[:, :C]


# ----------------------------------------------------------------------------
# Parameter init (synthetic, deterministic) + pure-JAX reference
# ----------------------------------------------------------------------------
def init_params(key, input_dim, hidden_dim, num_classes, reduction=16):
    red = max(hidden_dim // reduction, 1)
    ks = jax.random.split(key, 8)
    # weights stored as [in, out]
    w1  = jax.random.normal(ks[0], (input_dim, hidden_dim), jnp.float32) * 0.1
    b1  = jax.random.normal(ks[1], (1, hidden_dim), jnp.float32) * 0.01
    ws1 = jax.random.normal(ks[2], (hidden_dim, red), jnp.float32) * 0.1
    bs1 = jax.random.normal(ks[3], (1, red), jnp.float32) * 0.01
    ws2 = jax.random.normal(ks[4], (red, hidden_dim), jnp.float32) * 0.1
    bs2 = jax.random.normal(ks[5], (1, hidden_dim), jnp.float32) * 0.01
    w2  = jax.random.normal(ks[6], (hidden_dim, num_classes), jnp.float32) * 0.1
    b2  = jax.random.normal(ks[7], (1, num_classes), jnp.float32) * 0.01
    return (w1, b1, ws1, bs1, ws2, bs2, w2, b2)


def reference_forward(x, params):
    (w1, b1, ws1, bs1, ws2, bs2, w2, b2) = params
    h = jnp.maximum(x @ w1 + b1, 0.0)
    s = jnp.maximum(h @ ws1 + bs1, 0.0)
    s = jax.nn.sigmoid(s @ ws2 + bs2)
    h = h * s
    return h @ w2 + b2


if __name__ == "__main__":
    B, input_dim, hidden_dim, num_classes, reduction = 32, 32, 64, 8, 16

    key = jax.random.PRNGKey(0)
    kx, kp = jax.random.split(key)
    x = jax.random.normal(kx, (B, input_dim), jnp.float32)
    params = init_params(kp, input_dim, hidden_dim, num_classes, reduction)

    # One-time weight prep (padding + bf16 casts) -- not paid per forward call.
    prepared = prepare_params(params)

    # Auto tile policy picks tile_b=16 here -> grid=(2,), exercising the
    # pipelined / parallel batch grid.
    out = se_classifier_forward(x, prepared)
    out = jax.block_until_ready(out)

    ref = reference_forward(x, params)
    assert out.shape == (B, num_classes)
    # bf16 matmul operands + approx-reciprocal sigmoid -> bf16-level tolerance.
    assert jnp.allclose(out, ref, atol=3e-2, rtol=3e-2), "mismatch vs JAX reference"

    print("KERNEL_OK")
</pallas_src>

<mosaic_0001>
module attributes {stable_mosaic.version = 11 : i64} {
  func.func @se_classifier_kernel(%arg0: i32, %arg1: memref<16x32xf32, #tpu.memory_space<vmem>>, %arg2: memref<32x128xbf16, #tpu.memory_space<vmem>>, %arg3: memref<1x128xf32, #tpu.memory_space<vmem>>, %arg4: memref<128x128xbf16, #tpu.memory_space<vmem>>, %arg5: memref<1x128xf32, #tpu.memory_space<vmem>>, %arg6: memref<128x128xbf16, #tpu.memory_space<vmem>>, %arg7: memref<1x128xf32, #tpu.memory_space<vmem>>, %arg8: memref<128x128xbf16, #tpu.memory_space<vmem>>, %arg9: memref<1x128xf32, #tpu.memory_space<vmem>>, %arg10: memref<16x128xf32, #tpu.memory_space<vmem>>) attributes {dimension_semantics = [#tpu.dimension_semantics<parallel>], iteration_bounds = array<i64: 2>, scalar_prefetch = 0 : i64, scratch_operands = 0 : i64, tpu.core_type = #tpu.core_type<tc>, window_params = [{transform_indices = @transform_0, window_bounds = array<i64: 16, 32>}, {pipeline_mode = #tpu.pipeline_mode<synchronous>, transform_indices = @transform_1, window_bounds = array<i64: 32, 128>}, {pipeline_mode = #tpu.pipeline_mode<synchronous>, transform_indices = @transform_2, window_bounds = array<i64: 1, 128>}, {pipeline_mode = #tpu.pipeline_mode<synchronous>, transform_indices = @transform_3, window_bounds = array<i64: 128, 128>}, {pipeline_mode = #tpu.pipeline_mode<synchronous>, transform_indices = @transform_4, window_bounds = array<i64: 1, 128>}, {pipeline_mode = #tpu.pipeline_mode<synchronous>, transform_indices = @transform_5, window_bounds = array<i64: 128, 128>}, {pipeline_mode = #tpu.pipeline_mode<synchronous>, transform_indices = @transform_6, window_bounds = array<i64: 1, 128>}, {pipeline_mode = #tpu.pipeline_mode<synchronous>, transform_indices = @transform_7, window_bounds = array<i64: 128, 128>}, {pipeline_mode = #tpu.pipeline_mode<synchronous>, transform_indices = @transform_8, window_bounds = array<i64: 1, 128>}, {transform_indices = @transform_9, window_bounds = array<i64: 16, 128>}]} {
    %c0 = arith.constant 0 : index
    %c0_0 = arith.constant 0 : index
    %0 = vector.load %arg1[%c0, %c0_0] : memref<16x32xf32, #tpu.memory_space<vmem>>, vector<16x32xf32>
    %1 = arith.truncf %0 : vector<16x32xf32> to vector<16x32xbf16>
    %c0_1 = arith.constant 0 : index
    %c0_2 = arith.constant 0 : index
    %2 = vector.load %arg2[%c0_1, %c0_2] : memref<32x128xbf16, #tpu.memory_space<vmem>>, vector<32x128xbf16>
    %cst = arith.constant dense<0.000000e+00> : vector<16x128xf32>
    %3 = tpu.matmul %1, %2, %cst {dimension_numbers = #tpu.dot_dimension_numbers<[1], [0], [0], [1], [0, 0, 1, 1], [], []>} : vector<16x32xbf16>, vector<32x128xbf16>, vector<16x128xf32> -> vector<16x128xf32>
    %c0_3 = arith.constant 0 : index
    %c0_4 = arith.constant 0 : index
    %4 = vector.load %arg3[%c0_3, %c0_4] : memref<1x128xf32, #tpu.memory_space<vmem>>, vector<1x128xf32>
    %5 = vector.broadcast %4 : vector<1x128xf32> to vector<16x128xf32>
    %6 = arith.addf %3, %5 : vector<16x128xf32>
    %cst_5 = arith.constant 0.000000e+00 : f32
    %7 = vector.broadcast %cst_5 : f32 to vector<16x128xf32>
    %8 = arith.maximumf %6, %7 : vector<16x128xf32>
    %9 = arith.truncf %8 : vector<16x128xf32> to vector<16x128xbf16>
    %c0_6 = arith.constant 0 : index
    %c0_7 = arith.constant 0 : index
    %10 = vector.load %arg4[%c0_6, %c0_7] : memref<128x128xbf16, #tpu.memory_space<vmem>>, vector<128x128xbf16>
    %cst_8 = arith.constant dense<0.000000e+00> : vector<16x128xf32>
    %11 = tpu.matmul %9, %10, %cst_8 {dimension_numbers = #tpu.dot_dimension_numbers<[1], [0], [0], [1], [0, 0, 1, 1], [], []>} : vector<16x128xbf16>, vector<128x128xbf16>, vector<16x128xf32> -> vector<16x128xf32>
    %c0_9 = arith.constant 0 : index
    %c0_10 = arith.constant 0 : index
    %12 = vector.load %arg5[%c0_9, %c0_10] : memref<1x128xf32, #tpu.memory_space<vmem>>, vector<1x128xf32>
    %13 = vector.broadcast %12 : vector<1x128xf32> to vector<16x128xf32>
    %14 = arith.addf %11, %13 : vector<16x128xf32>
    %cst_11 = arith.constant 0.000000e+00 : f32
    %15 = vector.broadcast %cst_11 : f32 to vector<16x128xf32>
    %16 = arith.maximumf %14, %15 : vector<16x128xf32>
    %17 = arith.truncf %16 : vector<16x128xf32> to vector<16x128xbf16>
    %c0_12 = arith.constant 0 : index
    %c0_13 = arith.constant 0 : index
    %18 = vector.load %arg6[%c0_12, %c0_13] : memref<128x128xbf16, #tpu.memory_space<vmem>>, vector<128x128xbf16>
    %cst_14 = arith.constant dense<0.000000e+00> : vector<16x128xf32>
    %19 = tpu.matmul %17, %18, %cst_14 {dimension_numbers = #tpu.dot_dimension_numbers<[1], [0], [0], [1], [0, 0, 1, 1], [], []>} : vector<16x128xbf16>, vector<128x128xbf16>, vector<16x128xf32> -> vector<16x128xf32>
    %c0_15 = arith.constant 0 : index
    %c0_16 = arith.constant 0 : index
    %20 = vector.load %arg7[%c0_15, %c0_16] : memref<1x128xf32, #tpu.memory_space<vmem>>, vector<1x128xf32>
    %21 = vector.broadcast %20 : vector<1x128xf32> to vector<16x128xf32>
    %22 = arith.addf %19, %21 : vector<16x128xf32>
    %cst_17 = arith.constant 0.000000e+00 : f32
    %23 = vector.broadcast %cst_17 : f32 to vector<16x128xf32>
    %24 = arith.subf %23, %22 : vector<16x128xf32>
    %25 = math.exp %24 : vector<16x128xf32>
    %cst_18 = arith.constant 1.000000e+00 : f32
    %26 = vector.broadcast %cst_18 : f32 to vector<16x128xf32>
    %27 = arith.addf %26, %25 : vector<16x128xf32>
    %28 = tpu.reciprocal %27 {approx = true} : vector<16x128xf32> -> vector<16x128xf32>
    %29 = arith.mulf %8, %28 : vector<16x128xf32>
    %30 = arith.truncf %29 : vector<16x128xf32> to vector<16x128xbf16>
    %c0_19 = arith.constant 0 : index
    %c0_20 = arith.constant 0 : index
    %31 = vector.load %arg8[%c0_19, %c0_20] : memref<128x128xbf16, #tpu.memory_space<vmem>>, vector<128x128xbf16>
    %cst_21 = arith.constant dense<0.000000e+00> : vector<16x128xf32>
    %32 = tpu.matmul %30, %31, %cst_21 {dimension_numbers = #tpu.dot_dimension_numbers<[1], [0], [0], [1], [0, 0, 1, 1], [], []>} : vector<16x128xbf16>, vector<128x128xbf16>, vector<16x128xf32> -> vector<16x128xf32>
    %c0_22 = arith.constant 0 : index
    %c0_23 = arith.constant 0 : index
    %33 = vector.load %arg9[%c0_22, %c0_23] : memref<1x128xf32, #tpu.memory_space<vmem>>, vector<1x128xf32>
    %34 = vector.broadcast %33 : vector<1x128xf32> to vector<16x128xf32>
    %35 = arith.addf %32, %34 : vector<16x128xf32>
    %c0_24 = arith.constant 0 : index
    %c0_25 = arith.constant 0 : index
    %36 = vector.load %arg10[%c0_24, %c0_25] : memref<16x128xf32, #tpu.memory_space<vmem>>, vector<16x128xf32>
    tpu.vector_store %arg10[%c0_24, %c0_25], %35 {strides = array<i32>} : memref<16x128xf32, #tpu.memory_space<vmem>>, vector<16x128xf32>,
    return
  }
  func.func @transform_0(%arg0: i32) -> (i32, i32) {
    %c0_i32 = arith.constant 0 : i32
    %c0_i32_0 = arith.constant 0 : i32
    return %arg0, %c0_i32 : i32, i32
  }
  func.func @transform_1(%arg0: i32) -> (i32, i32) {
    %c0_i32 = arith.constant 0 : i32
    %c0_i32_0 = arith.constant 0 : i32
    %c0_i32_1 = arith.constant 0 : i32
    return %c0_i32, %c0_i32_0 : i32, i32
  }
  func.func @transform_2(%arg0: i32) -> (i32, i32) {
    %c0_i32 = arith.constant 0 : i32
    %c0_i32_0 = arith.constant 0 : i32
    %c0_i32_1 = arith.constant 0 : i32
    return %c0_i32, %c0_i32_0 : i32, i32
  }
  func.func @transform_3(%arg0: i32) -> (i32, i32) {
    %c0_i32 = arith.constant 0 : i32
    %c0_i32_0 = arith.constant 0 : i32
    %c0_i32_1 = arith.constant 0 : i32
    return %c0_i32, %c0_i32_0 : i32, i32
  }
  func.func @transform_4(%arg0: i32) -> (i32, i32) {
    %c0_i32 = arith.constant 0 : i32
    %c0_i32_0 = arith.constant 0 : i32
    %c0_i32_1 = arith.constant 0 : i32
    return %c0_i32, %c0_i32_0 : i32, i32
  }
  func.func @transform_5(%arg0: i32) -> (i32, i32) {
    %c0_i32 = arith.constant 0 : i32
    %c0_i32_0 = arith.constant 0 : i32
    %c0_i32_1 = arith.constant 0 : i32
    return %c0_i32, %c0_i32_0 : i32, i32
  }
  func.func @transform_6(%arg0: i32) -> (i32, i32) {
    %c0_i32 = arith.constant 0 : i32
    %c0_i32_0 = arith.constant 0 : i32
    %c0_i32_1 = arith.constant 0 : i32
    return %c0_i32, %c0_i32_0 : i32, i32
  }
  func.func @transform_7(%arg0: i32) -> (i32, i32) {
    %c0_i32 = arith.constant 0 : i32
    %c0_i32_0 = arith.constant 0 : i32
    %c0_i32_1 = arith.constant 0 : i32
    return %c0_i32, %c0_i32_0 : i32, i32
  }
  func.func @transform_8(%arg0: i32) -> (i32, i32) {
    %c0_i32 = arith.constant 0 : i32
    %c0_i32_0 = arith.constant 0 : i32
    %c0_i32_1 = arith.constant 0 : i32
    return %c0_i32, %c0_i32_0 : i32, i32
  }
  func.func @transform_9(%arg0: i32) -> (i32, i32) {
    %c0_i32 = arith.constant 0 : i32
    %c0_i32_0 = arith.constant 0 : i32
    return %arg0, %c0_i32 : i32, i32
  }
}

module attributes {stable_mosaic.version = 11 : i64} {
  func.func @se_classifier_kernel(%arg0: i32, %arg1: memref<16x32xf32, #tpu.memory_space<vmem>>, %arg2: memref<32x128xbf16, #tpu.memory_space<vmem>>, %arg3: memref<1x128xf32, #tpu.memory_space<vmem>>, %arg4: memref<128x128xbf16, #tpu.memory_space<vmem>>, %arg5: memref<1x128xf32, #tpu.memory_space<vmem>>, %arg6: memref<128x128xbf16, #tpu.memory_space<vmem>>, %arg7: memref<1x128xf32, #tpu.memory_space<vmem>>, %arg8: memref<128x128xbf16, #tpu.memory_space<vmem>>, %arg9: memref<1x128xf32, #tpu.memory_space<vmem>>, %arg10: memref<16x128xf32, #tpu.memory_space<vmem>>) attributes {dimension_semantics = [#tpu.dimension_semantics<parallel>], iteration_bounds = array<i64: 2>, scalar_prefetch = 0 : i64, scratch_operands = 0 : i64, tpu.core_type = #tpu.core_type<tc>, window_params = [{transform_indices = @transform_0, window_bounds = array<i64: 16, 32>}, {pipeline_mode = #tpu.pipeline_mode<synchronous>, transform_indices = @transform_1, window_bounds = array<i64: 32, 128>}, {pipeline_mode = #tpu.pipeline_mode<synchronous>, transform_indices = @transform_2, window_bounds = array<i64: 1, 128>}, {pipeline_mode = #tpu.pipeline_mode<synchronous>, transform_indices = @transform_3, window_bounds = array<i64: 128, 128>}, {pipeline_mode = #tpu.pipeline_mode<synchronous>, transform_indices = @transform_4, window_bounds = array<i64: 1, 128>}, {pipeline_mode = #tpu.pipeline_mode<synchronous>, transform_indices = @transform_5, window_bounds = array<i64: 128, 128>}, {pipeline_mode = #tpu.pipeline_mode<synchronous>, transform_indices = @transform_6, window_bounds = array<i64: 1, 128>}, {pipeline_mode = #tpu.pipeline_mode<synchronous>, transform_indices = @transform_7, window_bounds = array<i64: 128, 128>}, {pipeline_mode = #tpu.pipeline_mode<synchronous>, transform_indices = @transform_8, window_bounds = array<i64: 1, 128>}, {transform_indices = @transform_9, window_bounds = array<i64: 16, 128>}]} {
    %c0 = arith.constant 0 : index
    %c0_0 = arith.constant 0 : index
    %0 = vector.load %arg1[%c0, %c0_0] : memref<16x32xf32, #tpu.memory_space<vmem>>, vector<16x32xf32>
    %1 = arith.truncf %0 : vector<16x32xf32> to vector<16x32xbf16>
    %c0_1 = arith.constant 0 : index
    %c0_2 = arith.constant 0 : index
    %2 = vector.load %arg2[%c0_1, %c0_2] : memref<32x128xbf16, #tpu.memory_space<vmem>>, vector<32x128xbf16>
    %cst = arith.constant dense<0.000000e+00> : vector<16x128xf32>
    %3 = tpu.matmul %1, %2, %cst {dimension_numbers = #tpu.dot_dimension_numbers<[1], [0], [0], [1], [0, 0, 1, 1], [], []>} : vector<16x32xbf16>, vector<32x128xbf16>, vector<16x128xf32> -> vector<16x128xf32>
    %c0_3 = arith.constant 0 : index
    %c0_4 = arith.constant 0 : index
    %4 = vector.load %arg3[%c0_3, %c0_4] : memref<1x128xf32, #tpu.memory_space<vmem>>, vector<1x128xf32>
    %5 = vector.broadcast %4 : vector<1x128xf32> to vector<16x128xf32>
    %6 = arith.addf %3, %5 : vector<16x128xf32>
    %cst_5 = arith.constant 0.000000e+00 : f32
    %7 = vector.broadcast %cst_5 : f32 to vector<16x128xf32>
    %8 = arith.maximumf %6, %7 : vector<16x128xf32>
    %9 = arith.truncf %8 : vector<16x128xf32> to vector<16x128xbf16>
    %c0_6 = arith.constant 0 : index
    %c0_7 = arith.constant 0 : index
    %10 = vector.load %arg4[%c0_6, %c0_7] : memref<128x128xbf16, #tpu.memory_space<vmem>>, vector<128x128xbf16>
    %cst_8 = arith.constant dense<0.000000e+00> : vector<16x128xf32>
    %11 = tpu.matmul %9, %10, %cst_8 {dimension_numbers = #tpu.dot_dimension_numbers<[1], [0], [0], [1], [0, 0, 1, 1], [], []>} : vector<16x128xbf16>, vector<128x128xbf16>, vector<16x128xf32> -> vector<16x128xf32>
    %c0_9 = arith.constant 0 : index
    %c0_10 = arith.constant 0 : index
    %12 = vector.load %arg5[%c0_9, %c0_10] : memref<1x128xf32, #tpu.memory_space<vmem>>, vector<1x128xf32>
    %13 = vector.broadcast %12 : vector<1x128xf32> to vector<16x128xf32>
    %14 = arith.addf %11, %13 : vector<16x128xf32>
    %cst_11 = arith.constant 0.000000e+00 : f32
    %15 = vector.broadcast %cst_11 : f32 to vector<16x128xf32>
    %16 = arith.maximumf %14, %15 : vector<16x128xf32>
    %17 = arith.truncf %16 : vector<16x128xf32> to vector<16x128xbf16>
    %c0_12 = arith.constant 0 : index
    %c0_13 = arith.constant 0 : index
    %18 = vector.load %arg6[%c0_12, %c0_13] : memref<128x128xbf16, #tpu.memory_space<vmem>>, vector<128x128xbf16>
    %cst_14 = arith.constant dense<0.000000e+00> : vector<16x128xf32>
    %19 = tpu.matmul %17, %18, %cst_14 {dimension_numbers = #tpu.dot_dimension_numbers<[1], [0], [0], [1], [0, 0, 1, 1], [], []>} : vector<16x128xbf16>, vector<128x128xbf16>, vector<16x128xf32> -> vector<16x128xf32>
    %c0_15 = arith.constant 0 : index
    %c0_16 = arith.constant 0 : index
    %20 = vector.load %arg7[%c0_15, %c0_16] : memref<1x128xf32, #tpu.memory_space<vmem>>, vector<1x128xf32>
    %21 = vector.broadcast %20 : vector<1x128xf32> to vector<16x128xf32>
    %22 = arith.addf %19, %21 : vector<16x128xf32>
    %cst_17 = arith.constant 0.000000e+00 : f32
    %23 = vector.broadcast %cst_17 : f32 to vector<16x128xf32>
    %24 = arith.subf %23, %22 : vector<16x128xf32>
    %25 = math.exp %24 : vector<16x128xf32>
    %cst_18 = arith.constant 1.000000e+00 : f32
    %26 = vector.broadcast %cst_18 : f32 to vector<16x128xf32>
    %27 = arith.addf %26, %25 : vector<16x128xf32>
    %28 = tpu.reciprocal %27 {approx = true} : vector<16x128xf32> -> vector<16x128xf32>
    %29 = arith.mulf %8, %28 : vector<16x128xf32>
    %30 = arith.truncf %29 : vector<16x128xf32> to vector<16x128xbf16>
    %c0_19 = arith.constant 0 : index
    %c0_20 = arith.constant 0 : index
    %31 = vector.load %arg8[%c0_19, %c0_20] : memref<128x128xbf16, #tpu.memory_space<vmem>>, vector<128x128xbf16>
    %cst_21 = arith.constant dense<0.000000e+00> : vector<16x128xf32>
    %32 = tpu.matmul %30, %31, %cst_21 {dimension_numbers = #tpu.dot_dimension_numbers<[1], [0], [0], [1], [0, 0, 1, 1], [], []>} : vector<16x128xbf16>, vector<128x128xbf16>, vector<16x128xf32> -> vector<16x128xf32>
    %c0_22 = arith.constant 0 : index
    %c0_23 = arith.constant 0 : index
    %33 = vector.load %arg9[%c0_22, %c0_23] : memref<1x128xf32, #tpu.memory_space<vmem>>, vector<1x128xf32>
    %34 = vector.broadcast %33 : vector<1x128xf32> to vector<16x128xf32>
    %35 = arith.addf %32, %34 : vector<16x128xf32>
    %c0_24 = arith.constant 0 : index
    %c0_25 = arith.constant 0 : index
    %36 = vector.load %arg10[%c0_24, %c0_25] : memref<16x128xf32, #tpu.memory_space<vmem>>, vector<16x128xf32>
    tpu.vector_store %arg10[%c0_24, %c0_25], %35 {strides = array<i32>} : memref<16x128xf32, #tpu.memory_space<vmem>>, vector<16x128xf32>,
    return
  }
  func.func @transform_0(%arg0: i32) -> (i32, i32) {
    %c0_i32 = arith.constant 0 : i32
    %c0_i32_0 = arith.constant 0 : i32
    return %arg0, %c0_i32 : i32, i32
  }
  func.func @transform_1(%arg0: i32) -> (i32, i32) {
    %c0_i32 = arith.constant 0 : i32
    %c0_i32_0 = arith.constant 0 : i32
    %c0_i32_1 = arith.constant 0 : i32
    return %c0_i32, %c0_i32_0 : i32, i32
  }
  func.func @transform_2(%arg0: i32) -> (i32, i32) {
    %c0_i32 = arith.constant 0 : i32
    %c0_i32_0 = arith.constant 0 : i32
    %c0_i32_1 = arith.constant 0 : i32
    return %c0_i32, %c0_i32_0 : i32, i32
  }
  func.func @transform_3(%arg0: i32) -> (i32, i32) {
    %c0_i32 = arith.constant 0 : i32
    %c0_i32_0 = arith.constant 0 : i32
    %c0_i32_1 = arith.constant 0 : i32
    return %c0_i32, %c0_i32_0 : i32, i32
  }
  func.func @transform_4(%arg0: i32) -> (i32, i32) {
    %c0_i32 = arith.constant 0 : i32
    %c0_i32_0 = arith.constant 0 : i32
    %c0_i32_1 = arith.constant 0 : i32
    return %c0_i32, %c0_i32_0 : i32, i32
  }
  func.func @transform_5(%arg0: i32) -> (i32, i32) {
    %c0_i32 = arith.constant 0 : i32
    %c0_i32_0 = arith.constant 0 : i32
    %c0_i32_1 = arith.constant 0 : i32
    return %c0_i32, %c0_i32_0 : i32, i32
  }
  func.func @transform_6(%arg0: i32) -> (i32, i32) {
    %c0_i32 = arith.constant 0 : i32
    %c0_i32_0 = arith.constant 0 : i32
    %c0_i32_1 = arith.constant 0 : i32
    return %c0_i32, %c0_i32_0 : i32, i32
  }
  func.func @transform_7(%arg0: i32) -> (i32, i32) {
    %c0_i32 = arith.constant 0 : i32
    %c0_i32_0 = arith.constant 0 : i32
    %c0_i32_1 = arith.constant 0 : i32
    return %c0_i32, %c0_i32_0 : i32, i32
  }
  func.func @transform_8(%arg0: i32) -> (i32, i32) {
    %c0_i32 = arith.constant 0 : i32
    %c0_i32_0 = arith.constant 0 : i32
    %c0_i32_1 = arith.constant 0 : i32
    return %c0_i32, %c0_i32_0 : i32, i32
  }
  func.func @transform_9(%arg0: i32) -> (i32, i32) {
    %c0_i32 = arith.constant 0 : i32
    %c0_i32_0 = arith.constant 0 : i32
    return %arg0, %c0_i32 : i32, i32
  }
}

</mosaic_0001>

<llo_original>
// kernel: tpu_custom_call.1
$region0: #{tpu_custom_call.1}
  #allocation0 [shape = 'u32[]', space=smem, size = 0x4, offset = 0x4, fixed_abs, tag = 'smem constant byte address 0x4 - core index']
  #allocation1 [shape = 'u32[72,128]{1,0:T(1,128)}', space=vmem, size = 0x9000, scoped, tag = 'internal scratch']
  %s0 = inlined_call_operand.hbm [shape: f32[32,32], index: 0, kind: input, shape index: {}]
  %s1 = inlined_call_operand.hbm [shape: bf16[32,128], index: 1, kind: input, shape index: {}]
  %s2 = inlined_call_operand.vmem [shape: f32[1,128], index: 2, kind: input, shape index: {}]
  %s3 = inlined_call_operand.hbm [shape: bf16[128,128], index: 3, kind: input, shape index: {}]
  %s4 = inlined_call_operand.vmem [shape: f32[1,128], index: 4, kind: input, shape index: {}]
  %s5 = inlined_call_operand.hbm [shape: bf16[128,128], index: 5, kind: input, shape index: {}]
  %s6 = inlined_call_operand.vmem [shape: f32[1,128], index: 6, kind: input, shape index: {}]
  %s7 = inlined_call_operand.hbm [shape: bf16[128,128], index: 7, kind: input, shape index: {}]
  %s8 = inlined_call_operand.vmem [shape: f32[1,128], index: 8, kind: input, shape index: {}]
  %s9 = inlined_call_operand.hbm [shape: f32[32,128], index: 9, kind: output, shape index: {}]
  %s10 = sld [smem:[#allocation0]]
  $region89: #{tpu_custom_call.1} parent=0
    _
  %s12 = ssub.s32 1, %s10
  %s13 = scalar_select 0, %s12, %s10
  $region1: #{tpu_custom_call.1} parent=0
    #allocation2 [shape = 'u8[16384]{0}', space=vmem, size = 0x4000, scoped, tag = 'input window, operand 0']
    #allocation3 [shape = 's32[2]{0}', space=sflag, size = 0x8, scoped, tag = 'scoped memory for tpu_custom_call.1']
    #allocation4 [shape = 's32[2]{0}', space=sflag, size = 0x8, scoped, tag = 'scoped memory for tpu_custom_call.1']
    #allocation5 [shape = 'u8[8192]{0}', space=vmem, size = 0x2000, scoped, tag = 'input window, operand 1, single buffered']
    #allocation6 [shape = 's32[1]{0}', space=sflag, size = 0x4, scoped, tag = 'scoped memory for tpu_custom_call.1']
    #allocation7 [shape = 'u8[32768]{0}', space=vmem, size = 0x8000, scoped, tag = 'input window, operand 3, single buffered']
    #allocation8 [shape = 'u8[32768]{0}', space=vmem, size = 0x8000, scoped, tag = 'input window, operand 5, single buffered']
    #allocation9 [shape = 's32[1]{0}', space=sflag, size = 0x4, scoped, tag = 'scoped memory for tpu_custom_call.1']
    #allocation10 [shape = 'u8[32768]{0}', space=vmem, size = 0x8000, scoped, tag = 'input window, operand 7, single buffered']
    #allocation11 [shape = 'u8[16384]{0}', space=vmem, size = 0x4000, scoped, tag = 'output window, operand 0']
    %14 = vsyncpa [#allocation3], 0
    %s15 = scalar_lea.sflag [#allocation3], 1
    %16 = vsyncpa %s15, 0
    %17 = vsyncpa [#allocation6], 0
    %18 = vsyncpa [#allocation9], 0
    %19 = vsyncpa [#allocation4], 0
    %s20 = scalar_lea.sflag [#allocation4], 1
    %21 = vsyncpa %s20, 0
    loop: start=0, step=1, limit=4
    $region2: #{tpu_custom_call.1} parent=1 // loop_pre_header
      _
    $region3: #{tpu_custom_call.1} parent=1 // loop_header
      %s23 = sphi 0, %s27
      %p24 = scmp.ge.s32.totalorder %s23, 4
      %s33 = sphi 0, %s35
      %s36 = sphi 0, %s33
      %s37 = sphi 0, %s36
      %s53 = sphi 0, %s37
      %s57 = sphi 0, %s57
      %s59 = sphi 0, %s57
      %s60 = sphi 0, %s59
      %s74 = sphi 0, %s60
      %s78 = sphi 0, %s78
      %s80 = sphi 0, %s78
      %s81 = sphi 0, %s80
      %s95 = sphi 0, %s81
      %s99 = sphi 0, %s99
      %s101 = sphi 0, %s99
      %s102 = sphi 0, %s101
      %s116 = sphi 0, %s102
      %s120 = sphi 0, %s120
      %s122 = sphi 0, %s120
      %s123 = sphi 0, %s122
      %s137 = sphi 0, %s123
      %s141 = sphi 0, %s141
      %s143 = sphi 0, %s141
      %s144 = sphi 0, %s143
      %s158 = sphi 0, %s144
      %s162 = sphi 0, %s162
      %s164 = sphi 0, %s162
      %s165 = sphi 0, %s164
      %s179 = sphi 0, %s165
      %s183 = sphi 0, %s183
      %s185 = sphi 0, %s183
      %s186 = sphi 0, %s185
      %s200 = sphi 0, %s186
      %s204 = sphi 0, %s204
      %s206 = sphi 0, %s204
      %s207 = sphi 0, %s206
      %s221 = sphi 0, %s207
      %s227 = sphi 0, %s229
      %s230 = sphi 0, %s227
      %s231 = sphi 0, %s230
      %s247 = sphi 0, %s231
    $region4: #{tpu_custom_call.1} parent=1 // loop_header_branch
      %26 = sbr.rel (%p24) target = $region8
    $region5: #{tpu_custom_call.1} parent=1 // loop_body
      %s28 = ssub.s32 %s23, 1
      %s29 = ssub.s32 %s23, 2
      %s30 = sadd.s32 %s23, 1
      %s31 = ssub.s32 %s23, %s30
      %p32 = scmp.eq.s32.totalorder %s31, 0
      %s34 = sadd.s32 %s33, 1
      %s35 = scalar_select %p32, %s33, %s34
      %p38 = pneg %p32
      %p39 = scmp.eq.s32.totalorder %s23, 1
      %p40 = por %p38, %p39
      %p41 = scmp.ne.s32.totalorder %s33, %s36
      %p42 = scmp.eq.s32.totalorder %s23, 0
      %p43 = por %p41, %p42
      %p44 = scmp.ne.s32.totalorder %s33, %s36
      %p45 = scmp.eq.s32.totalorder %s28, 1
      %p46 = por %p44, %p45
      %p47 = scmp.ne.s32.totalorder %s36, %s37
      %p48 = scmp.eq.s32.totalorder %s28, 0
      %p49 = por %p47, %p48
      %p50 = scmp.ne.s32.totalorder %s36, %s37
      %p51 = scmp.eq.s32.totalorder %s29, 1
      %p52 = por %p50, %p51
      %p54 = scmp.ne.s32.totalorder %s37, %s53
      %p55 = scmp.eq.s32.totalorder %s29, 0
      %p56 = por %p54, %p55
      %s58 = sadd.s32 %s57, 1
      %p61 = scmp.eq.s32.totalorder %s23, 1
      %p62 = scmp.ne.s32.totalorder %s57, %s59
      %p63 = scmp.eq.s32.totalorder %s23, 0
      %p64 = por %p62, %p63
      %p65 = scmp.ne.s32.totalorder %s57, %s59
      %p66 = scmp.eq.s32.totalorder %s28, 1
      %p67 = por %p65, %p66
      %p68 = scmp.ne.s32.totalorder %s59, %s60
      %p69 = scmp.eq.s32.totalorder %s28, 0
      %p70 = por %p68, %p69
      %p71 = scmp.ne.s32.totalorder %s59, %s60
      %p72 = scmp.eq.s32.totalorder %s29, 1
      %p73 = por %p71, %p72
      %p75 = scmp.ne.s32.totalorder %s60, %s74
      %p76 = scmp.eq.s32.totalorder %s29, 0
      %p77 = por %p75, %p76
      %s79 = sadd.s32 %s78, 1
      %p82 = scmp.eq.s32.totalorder %s23, 1
      %p83 = scmp.ne.s32.totalorder %s78, %s80
      %p84 = scmp.eq.s32.totalorder %s23, 0
      %p85 = por %p83, %p84
      %p86 = scmp.ne.s32.totalorder %s78, %s80
      %p87 = scmp.eq.s32.totalorder %s28, 1
      %p88 = por %p86, %p87
      %p89 = scmp.ne.s32.totalorder %s80, %s81
      %p90 = scmp.eq.s32.totalorder %s28, 0
      %p91 = por %p89, %p90
      %p92 = scmp.ne.s32.totalorder %s80, %s81
      %p93 = scmp.eq.s32.totalorder %s29, 1
      %p94 = por %p92, %p93
      %p96 = scmp.ne.s32.totalorder %s81, %s95
      %p97 = scmp.eq.s32.totalorder %s29, 0
      %p98 = por %p96, %p97
      %s100 = sadd.s32 %s99, 1
      %p103 = scmp.eq.s32.totalorder %s23, 1
      %p104 = scmp.ne.s32.totalorder %s99, %s101
      %p105 = scmp.eq.s32.totalorder %s23, 0
      %p106 = por %p104, %p105
      %p107 = scmp.ne.s32.totalorder %s99, %s101
      %p108 = scmp.eq.s32.totalorder %s28, 1
      %p109 = por %p107, %p108
      %p110 = scmp.ne.s32.totalorder %s101, %s102
      %p111 = scmp.eq.s32.totalorder %s28, 0
      %p112 = por %p110, %p111
      %p113 = scmp.ne.s32.totalorder %s101, %s102
      %p114 = scmp.eq.s32.totalorder %s29, 1
      %p115 = por %p113, %p114
      %p117 = scmp.ne.s32.totalorder %s102, %s116
      %p118 = scmp.eq.s32.totalorder %s29, 0
      %p119 = por %p117, %p118
      %s121 = sadd.s32 %s120, 1
      %p124 = scmp.eq.s32.totalorder %s23, 1
      %p125 = scmp.ne.s32.totalorder %s120, %s122
      %p126 = scmp.eq.s32.totalorder %s23, 0
      %p127 = por %p125, %p126
      %p128 = scmp.ne.s32.totalorder %s120, %s122
      %p129 = scmp.eq.s32.totalorder %s28, 1
      %p130 = por %p128, %p129
      %p131 = scmp.ne.s32.totalorder %s122, %s123
      %p132 = scmp.eq.s32.totalorder %s28, 0
      %p133 = por %p131, %p132
      %p134 = scmp.ne.s32.totalorder %s122, %s123
      %p135 = scmp.eq.s32.totalorder %s29, 1
      %p136 = por %p134, %p135
      %p138 = scmp.ne.s32.totalorder %s123, %s137
      %p139 = scmp.eq.s32.totalorder %s29, 0
      %p140 = por %p138, %p139
      %s142 = sadd.s32 %s141, 1
      %p145 = scmp.eq.s32.totalorder %s23, 1
      %p146 = scmp.ne.s32.totalorder %s141, %s143
      %p147 = scmp.eq.s32.totalorder %s23, 0
      %p148 = por %p146, %p147
      %p149 = scmp.ne.s32.totalorder %s141, %s143
      %p150 = scmp.eq.s32.totalorder %s28, 1
      %p151 = por %p149, %p150
      %p152 = scmp.ne.s32.totalorder %s143, %s144
      %p153 = scmp.eq.s32.totalorder %s28, 0
      %p154 = por %p152, %p153
      %p155 = scmp.ne.s32.totalorder %s143, %s144
      %p156 = scmp.eq.s32.totalorder %s29, 1
      %p157 = por %p155, %p156
      %p159 = scmp.ne.s32.totalorder %s144, %s158
      %p160 = scmp.eq.s32.totalorder %s29, 0
      %p161 = por %p159, %p160
      %s163 = sadd.s32 %s162, 1
      %p166 = scmp.eq.s32.totalorder %s23, 1
      %p167 = scmp.ne.s32.totalorder %s162, %s164
      %p168 = scmp.eq.s32.totalorder %s23, 0
      %p169 = por %p167, %p168
      %p170 = scmp.ne.s32.totalorder %s162, %s164
      %p171 = scmp.eq.s32.totalorder %s28, 1
      %p172 = por %p170, %p171
      %p173 = scmp.ne.s32.totalorder %s164, %s165
      %p174 = scmp.eq.s32.totalorder %s28, 0
      %p175 = por %p173, %p174
      %p176 = scmp.ne.s32.totalorder %s164, %s165
      %p177 = scmp.eq.s32.totalorder %s29, 1
      %p178 = por %p176, %p177
      %p180 = scmp.ne.s32.totalorder %s165, %s179
      %p181 = scmp.eq.s32.totalorder %s29, 0
      %p182 = por %p180, %p181
      %s184 = sadd.s32 %s183, 1
      %p187 = scmp.eq.s32.totalorder %s23, 1
      %p188 = scmp.ne.s32.totalorder %s183, %s185
      %p189 = scmp.eq.s32.totalorder %s23, 0
      %p190 = por %p188, %p189
      %p191 = scmp.ne.s32.totalorder %s183, %s185
      %p192 = scmp.eq.s32.totalorder %s28, 1
      %p193 = por %p191, %p192
      %p194 = scmp.ne.s32.totalorder %s185, %s186
      %p195 = scmp.eq.s32.totalorder %s28, 0
      %p196 = por %p194, %p195
      %p197 = scmp.ne.s32.totalorder %s185, %s186
      %p198 = scmp.eq.s32.totalorder %s29, 1
      %p199 = por %p197, %p198
      %p201 = scmp.ne.s32.totalorder %s186, %s200
      %p202 = scmp.eq.s32.totalorder %s29, 0
      %p203 = por %p201, %p202
      %s205 = sadd.s32 %s204, 1
      %p208 = scmp.eq.s32.totalorder %s23, 1
      %p209 = scmp.ne.s32.totalorder %s204, %s206
      %p210 = scmp.eq.s32.totalorder %s23, 0
      %p211 = por %p209, %p210
      %p212 = scmp.ne.s32.totalorder %s204, %s206
      %p213 = scmp.eq.s32.totalorder %s28, 1
      %p214 = por %p212, %p213
      %p215 = scmp.ne.s32.totalorder %s206, %s207
      %p216 = scmp.eq.s32.totalorder %s28, 0
      %p217 = por %p215, %p216
      %p218 = scmp.ne.s32.totalorder %s206, %s207
      %p219 = scmp.eq.s32.totalorder %s29, 1
      %p220 = por %p218, %p219
      %p222 = scmp.ne.s32.totalorder %s207, %s221
      %p223 = scmp.eq.s32.totalorder %s29, 0
      %p224 = por %p222, %p223
      %s225 = ssub.s32 %s23, %s30
      %p226 = scmp.eq.s32.totalorder %s225, 0
      %s228 = sadd.s32 %s227, 1
      %s229 = scalar_select %p226, %s227, %s228
      %p232 = pneg %p226
      %p233 = scmp.eq.s32.totalorder %s23, 1
      %p234 = por %p232, %p233
      %p235 = scmp.ne.s32.totalorder %s227, %s230
      %p236 = scmp.eq.s32.totalorder %s23, 0
      %p237 = por %p235, %p236
      %p238 = scmp.ne.s32.totalorder %s227, %s230
      %p239 = scmp.eq.s32.totalorder %s28, 1
      %p240 = por %p238, %p239
      %p241 = scmp.ne.s32.totalorder %s230, %s231
      %p242 = scmp.eq.s32.totalorder %s28, 0
      %p243 = por %p241, %p242
      %p244 = scmp.ne.s32.totalorder %s230, %s231
      %p245 = scmp.eq.s32.totalorder %s29, 1
      %p246 = por %p244, %p245
      %p248 = scmp.ne.s32.totalorder %s231, %s247
      %p249 = scmp.eq.s32.totalorder %s29, 0
      %p250 = por %p248, %p249
      %p251 = scmp.le.s32.totalorder 1, %s23
      %p252 = scmp.lt.s32.totalorder %s23, 3
      %p253 = pnand %p251, %p252
      %p254 = pneg %p253
      // Predicated region
      $region9: #{tpu_custom_call.1} parent=5 // pred_check
        _
      $region10: #{tpu_custom_call.1} parent=5 // pred_check_branch
        %256 = sbr.rel (%p253) target = $region12
      $region11: #{tpu_custom_call.1} parent=5 // pred_region
        %s257 = ssub.s32 %s23, 1
        // Predicated region
        $region13: #{tpu_custom_call.1} parent=11 // pred_check
          %p258 = pneg %p70
        $region14: #{tpu_custom_call.1} parent=11 // pred_check_branch
          %260 = sbr.rel (%p258) target = $region16
        $region15: #{tpu_custom_call.1} parent=11 // pred_region
          %262 = vsyncadd [#allocation6], 0
          %s263 = sshll.u32 %s1, 4
          %s264 = int_to_ptr.hbm [resolvable:$true] %s263
          %s265 = sshll.u32 [#allocation5], 4
          %s266 = int_to_ptr.vmem [resolvable:$true] %s265
          %271 = dma.hbm_to_vmem [thread:$0]  %s264, 256, %s266, [#allocation6], 64, 64, 4
        $region16: #{tpu_custom_call.1} parent=11 // pred_fallthru
          _
        // Predicated region
        $region17: #{tpu_custom_call.1} parent=11 // pred_check
          %p272 = pneg %p91
        $region18: #{tpu_custom_call.1} parent=11 // pred_check_branch
          %274 = sbr.rel (%p272) target = $region20
        $region19: #{tpu_custom_call.1} parent=11 // pred_region
          _
        $region20: #{tpu_custom_call.1} parent=11 // pred_fallthru
          _
        // Predicated region
        $region21: #{tpu_custom_call.1} parent=11 // pred_check
          %p275 = pneg %p112
        $region22: #{tpu_custom_call.1} parent=11 // pred_check_branch
          %277 = sbr.rel (%p275) target = $region24
        $region23: #{tpu_custom_call.1} parent=11 // pred_region
          %279 = vsyncadd [#allocation6], 0
          %s280 = sshll.u32 %s3, 4
          %s281 = int_to_ptr.hbm [resolvable:$true] %s280
          %s282 = sshll.u32 [#allocation7], 4
          %s283 = int_to_ptr.vmem [resolvable:$true] %s282
          %288 = dma.hbm_to_vmem [thread:$0]  %s281, 1024, %s283, [#allocation6], 64, 64, 4
        $region24: #{tpu_custom_call.1} parent=11 // pred_fallthru
          _
        // Predicated region
        $region25: #{tpu_custom_call.1} parent=11 // pred_check
          %p289 = pneg %p133
        $region26: #{tpu_custom_call.1} parent=11 // pred_check_branch
          %291 = sbr.rel (%p289) target = $region28
        $region27: #{tpu_custom_call.1} parent=11 // pred_region
          _
        $region28: #{tpu_custom_call.1} parent=11 // pred_fallthru
          _
        // Predicated region
        $region29: #{tpu_custom_call.1} parent=11 // pred_check
          %p292 = pneg %p154
        $region30: #{tpu_custom_call.1} parent=11 // pred_check_branch
          %294 = sbr.rel (%p292) target = $region32
        $region31: #{tpu_custom_call.1} parent=11 // pred_region
          %296 = vsyncadd [#allocation9], 0
          %s297 = sshll.u32 %s5, 4
          %s298 = int_to_ptr.hbm [resolvable:$true] %s297
          %s299 = sshll.u32 [#allocation8], 4
          %s300 = int_to_ptr.vmem [resolvable:$true] %s299
          %305 = dma.hbm_to_vmem [thread:$0]  %s298, 1024, %s300, [#allocation9], 64, 64, 4
        $region32: #{tpu_custom_call.1} parent=11 // pred_fallthru
          _
        // Predicated region
        $region33: #{tpu_custom_call.1} parent=11 // pred_check
          %p306 = pneg %p175
        $region34: #{tpu_custom_call.1} parent=11 // pred_check_branch
          %308 = sbr.rel (%p306) target = $region36
        $region35: #{tpu_custom_call.1} parent=11 // pred_region
          _
        $region36: #{tpu_custom_call.1} parent=11 // pred_fallthru
          _
        // Predicated region
        $region37: #{tpu_custom_call.1} parent=11 // pred_check
          %p309 = pneg %p196
        $region38: #{tpu_custom_call.1} parent=11 // pred_check_branch
          %311 = sbr.rel (%p309) target = $region40
        $region39: #{tpu_custom_call.1} parent=11 // pred_region
          %313 = vsyncadd [#allocation9], 0
          %s314 = sshll.u32 %s7, 4
          %s315 = int_to_ptr.hbm [resolvable:$true] %s314
          %s316 = sshll.u32 [#allocation10], 4
          %s317 = int_to_ptr.vmem [resolvable:$true] %s316
          %322 = dma.hbm_to_vmem [thread:$0]  %s315, 1024, %s317, [#allocation9], 64, 64, 4
        $region40: #{tpu_custom_call.1} parent=11 // pred_fallthru
          _
        // Predicated region
        $region41: #{tpu_custom_call.1} parent=11 // pred_check
          %p323 = pneg %p217
        $region42: #{tpu_custom_call.1} parent=11 // pred_check_branch
          %325 = sbr.rel (%p323) target = $region44
        $region43: #{tpu_custom_call.1} parent=11 // pred_region
          _
        $region44: #{tpu_custom_call.1} parent=11 // pred_fallthru
          _
      $region12: #{tpu_custom_call.1} parent=5 // pred_fallthru
        _
      %p326 = scmp.lt.s32.totalorder %s23, 2
      // Predicated region
      $region45: #{tpu_custom_call.1} parent=5 // pred_check
        %p327 = pneg %p326
      $region46: #{tpu_custom_call.1} parent=5 // pred_check_branch
        %329 = sbr.rel (%p327) target = $region48
      $region47: #{tpu_custom_call.1} parent=5 // pred_region
        // Predicated region
        $region49: #{tpu_custom_call.1} parent=47 // pred_check
          %p330 = pneg %p43
        $region50: #{tpu_custom_call.1} parent=47 // pred_check_branch
          %332 = sbr.rel (%p330) target = $region52
        $region51: #{tpu_custom_call.1} parent=47 // pred_region
          %s333 = sand.u32 %s33, 1
          %s334 = scalar_lea.sflag [#allocation3], %s333
          %s335 = sand.u32 %s33, 1
          %s336 = smul.addr %s335, 16
          %s337 = scalar_lea.vmem [#allocation2], %s336
          %s338 = smul.u32 2, %s23
          %340 = vsyncadd %s334, 0
          %s341 = smul.addr %s338, 8
          %s342 = scalar_lea.hbm %s0, %s341
          %s343 = sshll.u32 %s342, 4
          %s344 = int_to_ptr.hbm [resolvable:$true] %s343
          %s345 = sshll.u32 %s337, 4
          %s346 = int_to_ptr.vmem [resolvable:$true] %s345
          %351 = dma.hbm_to_vmem [thread:$0]  %s344, 256, %s346, %s334, 128, 128, 8
        $region52: #{tpu_custom_call.1} parent=47 // pred_fallthru
          _
      $region48: #{tpu_custom_call.1} parent=5 // pred_fallthru
        _
      %p352 = scmp.le.s32.totalorder 1, %s23
      %p353 = scmp.lt.s32.totalorder %s23, 3
      %p354 = pnand %p352, %p353
      %p355 = pneg %p354
      // Predicated region
      $region53: #{tpu_custom_call.1} parent=5 // pred_check
        _
      $region54: #{tpu_custom_call.1} parent=5 // pred_check_branch
        %357 = sbr.rel (%p354) target = $region56
      $region55: #{tpu_custom_call.1} parent=5 // pred_region
        %s358 = ssub.s32 %s23, 1
        %s359 = sand.u32 %s36, 1
        %s360 = scalar_lea.sflag [#allocation3], %s359
        %s361 = sand.u32 %s36, 1
        %s362 = smul.addr %s361, 16
        %s363 = scalar_lea.vmem [#allocation2], %s362
        // Predicated region
        $region57: #{tpu_custom_call.1} parent=55 // pred_check
          %p364 = pneg %p49
        $region58: #{tpu_custom_call.1} parent=55 // pred_check_branch
          %366 = sbr.rel (%p364) target = $region60
        $region59: #{tpu_custom_call.1} parent=55 // pred_region
          %368 = dma.done %s360, 256
        $region60: #{tpu_custom_call.1} parent=55 // pred_fallthru
          _
        // Predicated region
        $region61: #{tpu_custom_call.1} parent=55 // pred_check
          %p369 = pneg %p70
        $region62: #{tpu_custom_call.1} parent=55 // pred_check_branch
          %371 = sbr.rel (%p369) target = $region64
        $region63: #{tpu_custom_call.1} parent=55 // pred_region
          %373 = dma.done [#allocation6], 256
        $region64: #{tpu_custom_call.1} parent=55 // pred_fallthru
          _
        // Predicated region
        $region65: #{tpu_custom_call.1} parent=55 // pred_check
          %p374 = pneg %p112
        $region66: #{tpu_custom_call.1} parent=55 // pred_check_branch
          %376 = sbr.rel (%p374) target = $region68
        $region67: #{tpu_custom_call.1} parent=55 // pred_region
          %378 = dma.done [#allocation6], 1024
        $region68: #{tpu_custom_call.1} parent=55 // pred_fallthru
          _
        // Predicated region
        $region69: #{tpu_custom_call.1} parent=55 // pred_check
          %p379 = pneg %p154
        $region70: #{tpu_custom_call.1} parent=55 // pred_check_branch
          %381 = sbr.rel (%p379) target = $region72
        $region71: #{tpu_custom_call.1} parent=55 // pred_region
          %383 = dma.done [#allocation9], 1024
        $region72: #{tpu_custom_call.1} parent=55 // pred_fallthru
          _
        // Predicated region
        $region73: #{tpu_custom_call.1} parent=55 // pred_check
          %p384 = pneg %p196
        $region74: #{tpu_custom_call.1} parent=55 // pred_check_branch
          %386 = sbr.rel (%p384) target = $region76
        $region75: #{tpu_custom_call.1} parent=55 // pred_region
          %388 = dma.done [#allocation9], 1024
        $region76: #{tpu_custom_call.1} parent=55 // pred_fallthru
          _
        %s389 = sand.u32 %s36, 1
        %s390 = scalar_lea.sflag [#allocation3], %s389
        %s391 = sand.u32 %s36, 1
        %s392 = smul.addr %s391, 16
        %s393 = scalar_lea.vmem [#allocation2], %s392
        %p394 = pneg %p49
        %p395 = pneg %p46
        %p396 = pneg %p70
        %p397 = pneg %p67
        %p398 = pneg %p91
        %p399 = pneg %p88
        %p400 = pneg %p112
        %p401 = pneg %p109
        %p402 = pneg %p133
        %p403 = pneg %p130
        %p404 = pneg %p154
        %p405 = pneg %p151
        %p406 = pneg %p175
        %p407 = pneg %p172
        %p408 = pneg %p196
        %p409 = pneg %p193
        %p410 = pneg %p217
        %p411 = pneg %p214
        %p412 = pneg %p243
        %p413 = pneg %p240
        %s414 = sand.u32 %s230, 1
        %s415 = scalar_lea.sflag [#allocation4], %s414
        %s416 = sand.u32 %s230, 1
        %s417 = smul.addr %s416, 16
        %s418 = scalar_lea.vmem [#allocation11], %s417
        %s419 = smul.u32 2, %s28
        %s420 = smul.u32 2, %s28
        %v422 = vld [vmem:[%s363] sm:$0xff]
        %v423 = vld [vmem:[%s363 + $0x8] sm:$0xff]
        %v424 = vpack.c.bf16 %v423, %v422
        %v425 = vld [vmem:[#allocation5] sm:$0xf]
        %v426 = vld [vmem:[#allocation5 + $0x4] sm:$0xf]
        %v427 = vld [vmem:[#allocation5 + $0x8] sm:$0xf]
        %v428 = vld [vmem:[#allocation5 + $0xc] sm:$0xf]
        %v429 = vld [vmem:[%s2] sm:$0x1]
        %v431 = vperm.slane %v429, 0
        %v437 = vunpack.c.l.b16 %v425
        %v438 = vunpack.c.l.b16 %v426
        %v439 = vunpack.c.l.b16 %v427
        %v440 = vunpack.c.l.b16 %v428
        %v441 = vpack.c.b16 %v438, %v437
        %v442 = vpack.c.b16 %v440, %v439
        %vm445 = vcmask 261120
        %v447 = vsel %vm445, %v424, 0
        %449 = vmatpush.bf16.msra.mxu0 0
        %450 = vmatpush.bf16.msra.mxu0 0
        %451 = vmatpush.bf16.msra.mxu0 0
        %452 = vmatpush.bf16.msra.mxu0 0
        %453 = vmatpush.bf16.msra.mxu0 0
        %454 = vmatpush.bf16.msra.mxu0 0
        %455 = vmatpush.bf16.msra.mxu0 %v442
        %456 = vmatpush.bf16.msra.mxu0 %v441
        %457 = vmatmul.bf16.gmra.mxu0 %v447
        %v458 = vpop.f32.mrf.mxu0
        %v459 = vadd.f32 %v431, %v458
        %v460 = vpop.f32.mrf.mxu0
        %v461 = vadd.f32 %v431, %v460
        %462 = vdwg.mxu0
        %v463 = vmax.f32 %v459, 0.0
        %v464 = vmax.f32 %v461, 0.0
        %v465 = vpack.c.bf16 %v464, %v463
        %v466 = vld [vmem:[#allocation7] sm:$0xf]
        %v467 = vld [vmem:[#allocation7 + $0x4] sm:$0xf]
        %v468 = vld [vmem:[#allocation7 + $0x8] sm:$0xf]
        %v469 = vld [vmem:[#allocation7 + $0xc] sm:$0xf]
        %v470 = vld [vmem:[#allocation7 + $0x10] sm:$0xf]
        %v471 = vld [vmem:[#allocation7 + $0x14] sm:$0xf]
        %v472 = vld [vmem:[#allocation7 + $0x18] sm:$0xf]
        %v473 = vld [vmem:[#allocation7 + $0x1c] sm:$0xf]
        %v474 = vld [vmem:[#allocation7 + $0x20] sm:$0xf]
        %v475 = vld [vmem:[#allocation7 + $0x24] sm:$0xf]
        %v476 = vld [vmem:[#allocation7 + $0x28] sm:$0xf]
        %v477 = vld [vmem:[#allocation7 + $0x2c] sm:$0xf]
        %v478 = vld [vmem:[#allocation7 + $0x30] sm:$0xf]
        %v479 = vld [vmem:[#allocation7 + $0x34] sm:$0xf]
        %v480 = vld [vmem:[#allocation7 + $0x38] sm:$0xf]
        %v481 = vld [vmem:[#allocation7 + $0x3c] sm:$0xf]
        %v482 = vld [vmem:[%s4] sm:$0x1]
        %v484 = vperm.slane %v482, 0
        %v502 = vunpack.c.l.b16 %v466
        %v503 = vunpack.c.l.b16 %v467
        %v504 = vunpack.c.l.b16 %v468
        %v505 = vunpack.c.l.b16 %v469
        %v506 = vunpack.c.l.b16 %v470
        %v507 = vunpack.c.l.b16 %v471
        %v508 = vunpack.c.l.b16 %v472
        %v509 = vunpack.c.l.b16 %v473
        %v510 = vunpack.c.l.b16 %v474
        %v511 = vunpack.c.l.b16 %v475
        %v512 = vunpack.c.l.b16 %v476
        %v513 = vunpack.c.l.b16 %v477
        %v514 = vunpack.c.l.b16 %v478
        %v515 = vunpack.c.l.b16 %v479
        %v516 = vunpack.c.l.b16 %v480
        %v517 = vunpack.c.l.b16 %v481
        %v518 = vpack.c.b16 %v503, %v502
        %v519 = vpack.c.b16 %v505, %v504
        %v520 = vpack.c.b16 %v507, %v506
        %v521 = vpack.c.b16 %v509, %v508
        %v522 = vpack.c.b16 %v511, %v510
        %v523 = vpack.c.b16 %v513, %v512
        %v524 = vpack.c.b16 %v515, %v514
        %v525 = vpack.c.b16 %v517, %v516
        %534 = vmatpush.bf16.msra.mxu0 %v525
        %535 = vmatpush.bf16.msra.mxu0 %v524
        %536 = vmatpush.bf16.msra.mxu0 %v523
        %537 = vmatpush.bf16.msra.mxu0 %v522
        %538 = vmatpush.bf16.msra.mxu0 %v521
        %539 = vmatpush.bf16.msra.mxu0 %v520
        %540 = vmatpush.bf16.msra.mxu0 %v519
        %541 = vmatpush.bf16.msra.mxu0 %v518
        %542 = vmatmul.bf16.gmra.mxu0 %v465
        %v543 = vpop.f32.mrf.mxu0
        %v544 = vadd.f32 %v484, %v543
        %v545 = vpop.f32.mrf.mxu0
        %v546 = vadd.f32 %v484, %v545
        %547 = vdwg.mxu0
        %v548 = vmax.f32 %v544, 0.0
        %v549 = vmax.f32 %v546, 0.0
        %v550 = vpack.c.bf16 %v549, %v548
        %v551 = vld [vmem:[#allocation8] sm:$0xf]
        %v552 = vld [vmem:[#allocation8 + $0x4] sm:$0xf]
        %v553 = vld [vmem:[#allocation8 + $0x8] sm:$0xf]
        %v554 = vld [vmem:[#allocation8 + $0xc] sm:$0xf]
        %v555 = vld [vmem:[#allocation8 + $0x10] sm:$0xf]
        %v556 = vld [vmem:[#allocation8 + $0x14] sm:$0xf]
        %v557 = vld [vmem:[#allocation8 + $0x18] sm:$0xf]
        %v558 = vld [vmem:[#allocation8 + $0x1c] sm:$0xf]
        %v559 = vld [vmem:[#allocation8 + $0x20] sm:$0xf]
        %v560 = vld [vmem:[#allocation8 + $0x24] sm:$0xf]
        %v561 = vld [vmem:[#allocation8 + $0x28] sm:$0xf]
        %v562 = vld [vmem:[#allocation8 + $0x2c] sm:$0xf]
        %v563 = vld [vmem:[#allocation8 + $0x30] sm:$0xf]
        %v564 = vld [vmem:[#allocation8 + $0x34] sm:$0xf]
        %v565 = vld [vmem:[#allocation8 + $0x38] sm:$0xf]
        %v566 = vld [vmem:[#allocation8 + $0x3c] sm:$0xf]
        %v567 = vld [vmem:[%s6] sm:$0x1]
        %v569 = vperm.slane %v567, 0
        %v587 = vunpack.c.l.b16 %v551
        %v588 = vunpack.c.l.b16 %v552
        %v589 = vunpack.c.l.b16 %v553
        %v590 = vunpack.c.l.b16 %v554
        %v591 = vunpack.c.l.b16 %v555
        %v592 = vunpack.c.l.b16 %v556
        %v593 = vunpack.c.l.b16 %v557
        %v594 = vunpack.c.l.b16 %v558
        %v595 = vunpack.c.l.b16 %v559
        %v596 = vunpack.c.l.b16 %v560
        %v597 = vunpack.c.l.b16 %v561
        %v598 = vunpack.c.l.b16 %v562
        %v599 = vunpack.c.l.b16 %v563
        %v600 = vunpack.c.l.b16 %v564
        %v601 = vunpack.c.l.b16 %v565
        %v602 = vunpack.c.l.b16 %v566
        %v603 = vpack.c.b16 %v588, %v587
        %v604 = vpack.c.b16 %v590, %v589
        %v605 = vpack.c.b16 %v592, %v591
        %v606 = vpack.c.b16 %v594, %v593
        %v607 = vpack.c.b16 %v596, %v595
        %v608 = vpack.c.b16 %v598, %v597
        %v609 = vpack.c.b16 %v600, %v599
        %v610 = vpack.c.b16 %v602, %v601
        %619 = vmatpush.bf16.msra.mxu0 %v610
        %620 = vmatpush.bf16.msra.mxu0 %v609
        %621 = vmatpush.bf16.msra.mxu0 %v608
        %622 = vmatpush.bf16.msra.mxu0 %v607
        %623 = vmatpush.bf16.msra.mxu0 %v606
        %624 = vmatpush.bf16.msra.mxu0 %v605
        %625 = vmatpush.bf16.msra.mxu0 %v604
        %626 = vmatpush.bf16.msra.mxu0 %v603
        %627 = vmatmul.bf16.gmra.mxu0 %v550
        %v628 = vpop.f32.mrf.mxu0
        %v629 = vadd.f32 %v569, %v628
        %v630 = vpop.f32.mrf.mxu0
        %v631 = vadd.f32 %v569, %v630
        %632 = vdwg.mxu0
        %v633 = vsub.f32 0.0, %v629
        %v634 = vsub.f32 0.0, %v631
        %v635 = vmul.f32 %v633, 1.442695
        %v636 = vpow.pop %v635
        %v637 = vmul.f32 %v634, 1.442695
        %v638 = vpow.pop %v637
        %v639 = vadd.f32 %v636, 1.0
        %v640 = vadd.f32 %v638, 1.0
        %v641 = vrcp.pop %v639
        %v642 = vrcp.pop %v640
        %v643 = vmul.f32 %v463, %v641
        %v644 = vmul.f32 %v464, %v642
        %v645 = vpack.c.bf16 %v644, %v643
        %v646 = vld [vmem:[#allocation10] sm:$0xf]
        %v647 = vld [vmem:[#allocation10 + $0x4] sm:$0xf]
        %v648 = vld [vmem:[#allocation10 + $0x8] sm:$0xf]
        %v649 = vld [vmem:[#allocation10 + $0xc] sm:$0xf]
        %v650 = vld [vmem:[#allocation10 + $0x10] sm:$0xf]
        %v651 = vld [vmem:[#allocation10 + $0x14] sm:$0xf]
        %v652 = vld [vmem:[#allocation10 + $0x18] sm:$0xf]
        %v653 = vld [vmem:[#allocation10 + $0x1c] sm:$0xf]
        %v654 = vld [vmem:[#allocation10 + $0x20] sm:$0xf]
        %v655 = vld [vmem:[#allocation10 + $0x24] sm:$0xf]
        %v656 = vld [vmem:[#allocation10 + $0x28] sm:$0xf]
        %v657 = vld [vmem:[#allocation10 + $0x2c] sm:$0xf]
        %v658 = vld [vmem:[#allocation10 + $0x30] sm:$0xf]
        %v659 = vld [vmem:[#allocation10 + $0x34] sm:$0xf]
        %v660 = vld [vmem:[#allocation10 + $0x38] sm:$0xf]
        %v661 = vld [vmem:[#allocation10 + $0x3c] sm:$0xf]
        %v662 = vld [vmem:[%s8] sm:$0x1]
        %v664 = vperm.slane %v662, 0
        %v682 = vunpack.c.l.b16 %v646
        %v683 = vunpack.c.l.b16 %v647
        %v684 = vunpack.c.l.b16 %v648
        %v685 = vunpack.c.l.b16 %v649
        %v686 = vunpack.c.l.b16 %v650
        %v687 = vunpack.c.l.b16 %v651
        %v688 = vunpack.c.l.b16 %v652
        %v689 = vunpack.c.l.b16 %v653
        %v690 = vunpack.c.l.b16 %v654
        %v691 = vunpack.c.l.b16 %v655
        %v692 = vunpack.c.l.b16 %v656
        %v693 = vunpack.c.l.b16 %v657
        %v694 = vunpack.c.l.b16 %v658
        %v695 = vunpack.c.l.b16 %v659
        %v696 = vunpack.c.l.b16 %v660
        %v697 = vunpack.c.l.b16 %v661
        %v698 = vpack.c.b16 %v683, %v682
        %v699 = vpack.c.b16 %v685, %v684
        %v700 = vpack.c.b16 %v687, %v686
        %v701 = vpack.c.b16 %v689, %v688
        %v702 = vpack.c.b16 %v691, %v690
        %v703 = vpack.c.b16 %v693, %v692
        %v704 = vpack.c.b16 %v695, %v694
        %v705 = vpack.c.b16 %v697, %v696
        %714 = vmatpush.bf16.msra.mxu0 %v705
        %715 = vmatpush.bf16.msra.mxu0 %v704
        %716 = vmatpush.bf16.msra.mxu0 %v703
        %717 = vmatpush.bf16.msra.mxu0 %v702
        %718 = vmatpush.bf16.msra.mxu0 %v701
        %719 = vmatpush.bf16.msra.mxu0 %v700
        %720 = vmatpush.bf16.msra.mxu0 %v699
        %721 = vmatpush.bf16.msra.mxu0 %v698
        %722 = vmatmul.bf16.gmra.mxu0 %v645
        %v723 = vpop.f32.mrf.mxu0
        %v724 = vadd.f32 %v664, %v723
        %v725 = vpop.f32.mrf.mxu0
        %v726 = vadd.f32 %v664, %v725
        %727 = vdwg.mxu0
        %728 = vst [vmem:[%s418] sm:$0xff] %v724
        %729 = vst [vmem:[%s418 + $0x8] sm:$0xff] %v726
        %s730 = sand.u32 %s230, 1
        %s731 = scalar_lea.sflag [#allocation4], %s730
        %s732 = sand.u32 %s230, 1
        %s733 = smul.addr %s732, 16
        %s734 = scalar_lea.vmem [#allocation11], %s733
        // Predicated region
        $region77: #{tpu_custom_call.1} parent=55 // pred_check
          %p735 = pneg %p240
        $region78: #{tpu_custom_call.1} parent=55 // pred_check_branch
          %737 = sbr.rel (%p735) target = $region80
        $region79: #{tpu_custom_call.1} parent=55 // pred_region
          %s738 = smul.u32 2, %s28
          %740 = vsyncadd %s731, 0
          %s741 = smul.addr %s738, 8
          %s742 = scalar_lea.hbm %s9, %s741
          %s743 = sshll.u32 %s734, 4
          %s744 = int_to_ptr.vmem [resolvable:$true] %s743
          %s745 = sshll.u32 %s742, 4
          %s746 = int_to_ptr.hbm [resolvable:$true] %s745
          %751 = dma.vmem_to_hbm [thread:$0]  %s744, 256, %s746, %s731, 128, 128, 8
        $region80: #{tpu_custom_call.1} parent=55 // pred_fallthru
          _
      $region56: #{tpu_custom_call.1} parent=5 // pred_fallthru
        _
      %p752 = scmp.le.s32.totalorder 2, %s23
      // Predicated region
      $region81: #{tpu_custom_call.1} parent=5 // pred_check
        %p753 = pneg %p752
      $region82: #{tpu_custom_call.1} parent=5 // pred_check_branch
        %755 = sbr.rel (%p753) target = $region84
      $region83: #{tpu_custom_call.1} parent=5 // pred_region
        %s756 = ssub.s32 %s23, 2
        // Predicated region
        $region85: #{tpu_custom_call.1} parent=83 // pred_check
          %p757 = pneg %p246
        $region86: #{tpu_custom_call.1} parent=83 // pred_check_branch
          %759 = sbr.rel (%p757) target = $region88
        $region87: #{tpu_custom_call.1} parent=83 // pred_region
          %s760 = sand.u32 %s231, 1
          %s761 = scalar_lea.sflag [#allocation4], %s760
          %s762 = sand.u32 %s231, 1
          %s763 = smul.addr %s762, 16
          %s764 = scalar_lea.vmem [#allocation11], %s763
          %766 = dma.done %s761, 256
        $region88: #{tpu_custom_call.1} parent=83 // pred_fallthru
          _
      $region84: #{tpu_custom_call.1} parent=5 // pred_fallthru
        _
    $region6: #{tpu_custom_call.1} parent=1 // loop_footer
      %s27 = sadd.s32 1, %s23
    $region7: #{tpu_custom_call.1} parent=1 // loop_footer_branch
      %22 = sbr.rel target = $region3
    $region8: #{tpu_custom_call.1} parent=1 // loop_exit
      _
    %767 = vsyncpa [#allocation3], 1
    %s768 = scalar_lea.sflag [#allocation3], 1
    %769 = vsyncpa %s768, 1
    %770 = vsyncpa [#allocation6], 1
    %771 = vsyncpa [#allocation9], 1
    %772 = vsyncpa [#allocation4], 1
    %s773 = scalar_lea.sflag [#allocation4], 1
    %774 = vsyncpa %s773, 1

// kernel: tpu_custom_call.1
$region0: #{tpu_custom_call.1}
  #allocation0 [shape = 'u32[]', space=smem, size = 0x4, offset = 0x4, fixed_abs, tag = 'smem constant byte address 0x4 - core index']
  #allocation1 [shape = 'u32[72,128]{1,0:T(1,128)}', space=vmem, size = 0x9000, scoped, tag = 'internal scratch']
  %s0 = inlined_call_operand.hbm [shape: f32[32,32], index: 0, kind: input, shape index: {}]
  %s1 = inlined_call_operand.hbm [shape: bf16[32,128], index: 1, kind: input, shape index: {}]
  %s2 = inlined_call_operand.vmem [shape: f32[1,128], index: 2, kind: input, shape index: {}]
  %s3 = inlined_call_operand.hbm [shape: bf16[128,128], index: 3, kind: input, shape index: {}]
  %s4 = inlined_call_operand.vmem [shape: f32[1,128], index: 4, kind: input, shape index: {}]
  %s5 = inlined_call_operand.hbm [shape: bf16[128,128], index: 5, kind: input, shape index: {}]
  %s6 = inlined_call_operand.vmem [shape: f32[1,128], index: 6, kind: input, shape index: {}]
  %s7 = inlined_call_operand.hbm [shape: bf16[128,128], index: 7, kind: input, shape index: {}]
  %s8 = inlined_call_operand.vmem [shape: f32[1,128], index: 8, kind: input, shape index: {}]
  %s9 = inlined_call_operand.hbm [shape: f32[32,128], index: 9, kind: output, shape index: {}]
  %s10 = sld [smem:[#allocation0]]
  $region89: #{tpu_custom_call.1} parent=0
    _
  %s12 = ssub.s32 1, %s10
  %s13 = scalar_select 0, %s12, %s10
  $region1: #{tpu_custom_call.1} parent=0
    #allocation2 [shape = 'u8[16384]{0}', space=vmem, size = 0x4000, scoped, tag = 'input window, operand 0']
    #allocation3 [shape = 's32[2]{0}', space=sflag, size = 0x8, scoped, tag = 'scoped memory for tpu_custom_call.1']
    #allocation4 [shape = 's32[2]{0}', space=sflag, size = 0x8, scoped, tag = 'scoped memory for tpu_custom_call.1']
    #allocation5 [shape = 'u8[8192]{0}', space=vmem, size = 0x2000, scoped, tag = 'input window, operand 1, single buffered']
    #allocation6 [shape = 's32[1]{0}', space=sflag, size = 0x4, scoped, tag = 'scoped memory for tpu_custom_call.1']
    #allocation7 [shape = 'u8[32768]{0}', space=vmem, size = 0x8000, scoped, tag = 'input window, operand 3, single buffered']
    #allocation8 [shape = 'u8[32768]{0}', space=vmem, size = 0x8000, scoped, tag = 'input window, operand 5, single buffered']
    #allocation9 [shape = 's32[1]{0}', space=sflag, size = 0x4, scoped, tag = 'scoped memory for tpu_custom_call.1']
    #allocation10 [shape = 'u8[32768]{0}', space=vmem, size = 0x8000, scoped, tag = 'input window, operand 7, single buffered']
    #allocation11 [shape = 'u8[16384]{0}', space=vmem, size = 0x4000, scoped, tag = 'output window, operand 0']
    %14 = vsyncpa [#allocation3], 0
    %s15 = scalar_lea.sflag [#allocation3], 1
    %16 = vsyncpa %s15, 0
    %17 = vsyncpa [#allocation6], 0
    %18 = vsyncpa [#allocation9], 0
    %19 = vsyncpa [#allocation4], 0
    %s20 = scalar_lea.sflag [#allocation4], 1
    %21 = vsyncpa %s20, 0
    loop: start=0, step=1, limit=4
    $region2: #{tpu_custom_call.1} parent=1 // loop_pre_header
      _
    $region3: #{tpu_custom_call.1} parent=1 // loop_header
      %s23 = sphi 0, %s27
      %p24 = scmp.ge.s32.totalorder %s23, 4
      %s33 = sphi 0, %s35
      %s36 = sphi 0, %s33
      %s37 = sphi 0, %s36
      %s53 = sphi 0, %s37
      %s57 = sphi 0, %s57
      %s59 = sphi 0, %s57
      %s60 = sphi 0, %s59
      %s74 = sphi 0, %s60
      %s78 = sphi 0, %s78
      %s80 = sphi 0, %s78
      %s81 = sphi 0, %s80
      %s95 = sphi 0, %s81
      %s99 = sphi 0, %s99
      %s101 = sphi 0, %s99
      %s102 = sphi 0, %s101
      %s116 = sphi 0, %s102
      %s120 = sphi 0, %s120
      %s122 = sphi 0, %s120
      %s123 = sphi 0, %s122
      %s137 = sphi 0, %s123
      %s141 = sphi 0, %s141
      %s143 = sphi 0, %s141
      %s144 = sphi 0, %s143
      %s158 = sphi 0, %s144
      %s162 = sphi 0, %s162
      %s164 = sphi 0, %s162
      %s165 = sphi 0, %s164
      %s179 = sphi 0, %s165
      %s183 = sphi 0, %s183
      %s185 = sphi 0, %s183
      %s186 = sphi 0, %s185
      %s200 = sphi 0, %s186
      %s204 = sphi 0, %s204
      %s206 = sphi 0, %s204
      %s207 = sphi 0, %s206
      %s221 = sphi 0, %s207
      %s227 = sphi 0, %s229
      %s230 = sphi 0, %s227
      %s231 = sphi 0, %s230
      %s247 = sphi 0, %s231
    $region4: #{tpu_custom_call.1} parent=1 // loop_header_branch
      %26 = sbr.rel (%p24) target = $region8
    $region5: #{tpu_custom_call.1} parent=1 // loop_body
      %s28 = ssub.s32 %s23, 1
      %s29 = ssub.s32 %s23, 2
      %s30 = sadd.s32 %s23, 1
      %s31 = ssub.s32 %s23, %s30
      %p32 = scmp.eq.s32.totalorder %s31, 0
      %s34 = sadd.s32 %s33, 1
      %s35 = scalar_select %p32, %s33, %s34
      %p38 = pneg %p32
      %p39 = scmp.eq.s32.totalorder %s23, 1
      %p40 = por %p38, %p39
      %p41 = scmp.ne.s32.totalorder %s33, %s36
      %p42 = scmp.eq.s32.totalorder %s23, 0
      %p43 = por %p41, %p42
      %p44 = scmp.ne.s32.totalorder %s33, %s36
      %p45 = scmp.eq.s32.totalorder %s28, 1
      %p46 = por %p44, %p45
      %p47 = scmp.ne.s32.totalorder %s36, %s37
      %p48 = scmp.eq.s32.totalorder %s28, 0
      %p49 = por %p47, %p48
      %p50 = scmp.ne.s32.totalorder %s36, %s37
      %p51 = scmp.eq.s32.totalorder %s29, 1
      %p52 = por %p50, %p51
      %p54 = scmp.ne.s32.totalorder %s37, %s53
      %p55 = scmp.eq.s32.totalorder %s29, 0
      %p56 = por %p54, %p55
      %s58 = sadd.s32 %s57, 1
      %p61 = scmp.eq.s32.totalorder %s23, 1
      %p62 = scmp.ne.s32.totalorder %s57, %s59
      %p63 = scmp.eq.s32.totalorder %s23, 0
      %p64 = por %p62, %p63
      %p65 = scmp.ne.s32.totalorder %s57, %s59
      %p66 = scmp.eq.s32.totalorder %s28, 1
      %p67 = por %p65, %p66
      %p68 = scmp.ne.s32.totalorder %s59, %s60
      %p69 = scmp.eq.s32.totalorder %s28, 0
      %p70 = por %p68, %p69
      %p71 = scmp.ne.s32.totalorder %s59, %s60
      %p72 = scmp.eq.s32.totalorder %s29, 1
      %p73 = por %p71, %p72
      %p75 = scmp.ne.s32.totalorder %s60, %s74
      %p76 = scmp.eq.s32.totalorder %s29, 0
      %p77 = por %p75, %p76
      %s79 = sadd.s32 %s78, 1
      %p82 = scmp.eq.s32.totalorder %s23, 1
      %p83 = scmp.ne.s32.totalorder %s78, %s80
      %p84 = scmp.eq.s32.totalorder %s23, 0
      %p85 = por %p83, %p84
      %p86 = scmp.ne.s32.totalorder %s78, %s80
      %p87 = scmp.eq.s32.totalorder %s28, 1
      %p88 = por %p86, %p87
      %p89 = scmp.ne.s32.totalorder %s80, %s81
      %p90 = scmp.eq.s32.totalorder %s28, 0
      %p91 = por %p89, %p90
      %p92 = scmp.ne.s32.totalorder %s80, %s81
      %p93 = scmp.eq.s32.totalorder %s29, 1
      %p94 = por %p92, %p93
      %p96 = scmp.ne.s32.totalorder %s81, %s95
      %p97 = scmp.eq.s32.totalorder %s29, 0
      %p98 = por %p96, %p97
      %s100 = sadd.s32 %s99, 1
      %p103 = scmp.eq.s32.totalorder %s23, 1
      %p104 = scmp.ne.s32.totalorder %s99, %s101
      %p105 = scmp.eq.s32.totalorder %s23, 0
      %p106 = por %p104, %p105
      %p107 = scmp.ne.s32.totalorder %s99, %s101
      %p108 = scmp.eq.s32.totalorder %s28, 1
      %p109 = por %p107, %p108
      %p110 = scmp.ne.s32.totalorder %s101, %s102
      %p111 = scmp.eq.s32.totalorder %s28, 0
      %p112 = por %p110, %p111
      %p113 = scmp.ne.s32.totalorder %s101, %s102
      %p114 = scmp.eq.s32.totalorder %s29, 1
      %p115 = por %p113, %p114
      %p117 = scmp.ne.s32.totalorder %s102, %s116
      %p118 = scmp.eq.s32.totalorder %s29, 0
      %p119 = por %p117, %p118
      %s121 = sadd.s32 %s120, 1
      %p124 = scmp.eq.s32.totalorder %s23, 1
      %p125 = scmp.ne.s32.totalorder %s120, %s122
      %p126 = scmp.eq.s32.totalorder %s23, 0
      %p127 = por %p125, %p126
      %p128 = scmp.ne.s32.totalorder %s120, %s122
      %p129 = scmp.eq.s32.totalorder %s28, 1
      %p130 = por %p128, %p129
      %p131 = scmp.ne.s32.totalorder %s122, %s123
      %p132 = scmp.eq.s32.totalorder %s28, 0
      %p133 = por %p131, %p132
      %p134 = scmp.ne.s32.totalorder %s122, %s123
      %p135 = scmp.eq.s32.totalorder %s29, 1
      %p136 = por %p134, %p135
      %p138 = scmp.ne.s32.totalorder %s123, %s137
      %p139 = scmp.eq.s32.totalorder %s29, 0
      %p140 = por %p138, %p139
      %s142 = sadd.s32 %s141, 1
      %p145 = scmp.eq.s32.totalorder %s23, 1
      %p146 = scmp.ne.s32.totalorder %s141, %s143
      %p147 = scmp.eq.s32.totalorder %s23, 0
      %p148 = por %p146, %p147
      %p149 = scmp.ne.s32.totalorder %s141, %s143
      %p150 = scmp.eq.s32.totalorder %s28, 1
      %p151 = por %p149, %p150
      %p152 = scmp.ne.s32.totalorder %s143, %s144
      %p153 = scmp.eq.s32.totalorder %s28, 0
      %p154 = por %p152, %p153
      %p155 = scmp.ne.s32.totalorder %s143, %s144
      %p156 = scmp.eq.s32.totalorder %s29, 1
      %p157 = por %p155, %p156
      %p159 = scmp.ne.s32.totalorder %s144, %s158
      %p160 = scmp.eq.s32.totalorder %s29, 0
      %p161 = por %p159, %p160
      %s163 = sadd.s32 %s162, 1
      %p166 = scmp.eq.s32.totalorder %s23, 1
      %p167 = scmp.ne.s32.totalorder %s162, %s164
      %p168 = scmp.eq.s32.totalorder %s23, 0
      %p169 = por %p167, %p168
      %p170 = scmp.ne.s32.totalorder %s162, %s164
      %p171 = scmp.eq.s32.totalorder %s28, 1
      %p172 = por %p170, %p171
      %p173 = scmp.ne.s32.totalorder %s164, %s165
      %p174 = scmp.eq.s32.totalorder %s28, 0
      %p175 = por %p173, %p174
      %p176 = scmp.ne.s32.totalorder %s164, %s165
      %p177 = scmp.eq.s32.totalorder %s29, 1
      %p178 = por %p176, %p177
      %p180 = scmp.ne.s32.totalorder %s165, %s179
      %p181 = scmp.eq.s32.totalorder %s29, 0
      %p182 = por %p180, %p181
      %s184 = sadd.s32 %s183, 1
      %p187 = scmp.eq.s32.totalorder %s23, 1
      %p188 = scmp.ne.s32.totalorder %s183, %s185
      %p189 = scmp.eq.s32.totalorder %s23, 0
      %p190 = por %p188, %p189
      %p191 = scmp.ne.s32.totalorder %s183, %s185
      %p192 = scmp.eq.s32.totalorder %s28, 1
      %p193 = por %p191, %p192
      %p194 = scmp.ne.s32.totalorder %s185, %s186
      %p195 = scmp.eq.s32.totalorder %s28, 0
      %p196 = por %p194, %p195
      %p197 = scmp.ne.s32.totalorder %s185, %s186
      %p198 = scmp.eq.s32.totalorder %s29, 1
      %p199 = por %p197, %p198
      %p201 = scmp.ne.s32.totalorder %s186, %s200
      %p202 = scmp.eq.s32.totalorder %s29, 0
      %p203 = por %p201, %p202
      %s205 = sadd.s32 %s204, 1
      %p208 = scmp.eq.s32.totalorder %s23, 1
      %p209 = scmp.ne.s32.totalorder %s204, %s206
      %p210 = scmp.eq.s32.totalorder %s23, 0
      %p211 = por %p209, %p210
      %p212 = scmp.ne.s32.totalorder %s204, %s206
      %p213 = scmp.eq.s32.totalorder %s28, 1
      %p214 = por %p212, %p213
      %p215 = scmp.ne.s32.totalorder %s206, %s207
      %p216 = scmp.eq.s32.totalorder %s28, 0
      %p217 = por %p215, %p216
      %p218 = scmp.ne.s32.totalorder %s206, %s207
      %p219 = scmp.eq.s32.totalorder %s29, 1
      %p220 = por %p218, %p219
      %p222 = scmp.ne.s32.totalorder %s207, %s221
      %p223 = scmp.eq.s32.totalorder %s29, 0
      %p224 = por %p222, %p223
      %s225 = ssub.s32 %s23, %s30
      %p226 = scmp.eq.s32.totalorder %s225, 0
      %s228 = sadd.s32 %s227, 1
      %s229 = scalar_select %p226, %s227, %s228
      %p232 = pneg %p226
      %p233 = scmp.eq.s32.totalorder %s23, 1
      %p234 = por %p232, %p233
      %p235 = scmp.ne.s32.totalorder %s227, %s230
      %p236 = scmp.eq.s32.totalorder %s23, 0
      %p237 = por %p235, %p236
      %p238 = scmp.ne.s32.totalorder %s227, %s230
      %p239 = scmp.eq.s32.totalorder %s28, 1
      %p240 = por %p238, %p239
      %p241 = scmp.ne.s32.totalorder %s230, %s231
      %p242 = scmp.eq.s32.totalorder %s28, 0
      %p243 = por %p241, %p242
      %p244 = scmp.ne.s32.totalorder %s230, %s231
      %p245 = scmp.eq.s32.totalorder %s29, 1
      %p246 = por %p244, %p245
      %p248 = scmp.ne.s32.totalorder %s231, %s247
      %p249 = scmp.eq.s32.totalorder %s29, 0
      %p250 = por %p248, %p249
      %p251 = scmp.le.s32.totalorder 1, %s23
      %p252 = scmp.lt.s32.totalorder %s23, 3
      %p253 = pnand %p251, %p252
      %p254 = pneg %p253
      // Predicated region
      $region9: #{tpu_custom_call.1} parent=5 // pred_check
        _
      $region10: #{tpu_custom_call.1} parent=5 // pred_check_branch
        %256 = sbr.rel (%p253) target = $region12
      $region11: #{tpu_custom_call.1} parent=5 // pred_region
        %s257 = ssub.s32 %s23, 1
        // Predicated region
        $region13: #{tpu_custom_call.1} parent=11 // pred_check
          %p258 = pneg %p70
        $region14: #{tpu_custom_call.1} parent=11 // pred_check_branch
          %260 = sbr.rel (%p258) target = $region16
        $region15: #{tpu_custom_call.1} parent=11 // pred_region
          %262 = vsyncadd [#allocation6], 0
          %s263 = sshll.u32 %s1, 4
          %s264 = int_to_ptr.hbm [resolvable:$true] %s263
          %s265 = sshll.u32 [#allocation5], 4
          %s266 = int_to_ptr.vmem [resolvable:$true] %s265
          %271 = dma.hbm_to_vmem [thread:$0]  %s264, 256, %s266, [#allocation6], 64, 64, 4
        $region16: #{tpu_custom_call.1} parent=11 // pred_fallthru
          _
        // Predicated region
        $region17: #{tpu_custom_call.1} parent=11 // pred_check
          %p272 = pneg %p91
        $region18: #{tpu_custom_call.1} parent=11 // pred_check_branch
          %274 = sbr.rel (%p272) target = $region20
        $region19: #{tpu_custom_call.1} parent=11 // pred_region
          _
        $region20: #{tpu_custom_call.1} parent=11 // pred_fallthru
          _
        // Predicated region
        $region21: #{tpu_custom_call.1} parent=11 // pred_check
          %p275 = pneg %p112
        $region22: #{tpu_custom_call.1} parent=11 // pred_check_branch
          %277 = sbr.rel (%p275) target = $region24
        $region23: #{tpu_custom_call.1} parent=11 // pred_region
          %279 = vsyncadd [#allocation6], 0
          %s280 = sshll.u32 %s3, 4
          %s281 = int_to_ptr.hbm [resolvable:$true] %s280
          %s282 = sshll.u32 [#allocation7], 4
          %s283 = int_to_ptr.vmem [resolvable:$true] %s282
          %288 = dma.hbm_to_vmem [thread:$0]  %s281, 1024, %s283, [#allocation6], 64, 64, 4
        $region24: #{tpu_custom_call.1} parent=11 // pred_fallthru
          _
        // Predicated region
        $region25: #{tpu_custom_call.1} parent=11 // pred_check
          %p289 = pneg %p133
        $region26: #{tpu_custom_call.1} parent=11 // pred_check_branch
          %291 = sbr.rel (%p289) target = $region28
        $region27: #{tpu_custom_call.1} parent=11 // pred_region
          _
        $region28: #{tpu_custom_call.1} parent=11 // pred_fallthru
          _
        // Predicated region
        $region29: #{tpu_custom_call.1} parent=11 // pred_check
          %p292 = pneg %p154
        $region30: #{tpu_custom_call.1} parent=11 // pred_check_branch
          %294 = sbr.rel (%p292) target = $region32
        $region31: #{tpu_custom_call.1} parent=11 // pred_region
          %296 = vsyncadd [#allocation9], 0
          %s297 = sshll.u32 %s5, 4
          %s298 = int_to_ptr.hbm [resolvable:$true] %s297
          %s299 = sshll.u32 [#allocation8], 4
          %s300 = int_to_ptr.vmem [resolvable:$true] %s299
          %305 = dma.hbm_to_vmem [thread:$0]  %s298, 1024, %s300, [#allocation9], 64, 64, 4
        $region32: #{tpu_custom_call.1} parent=11 // pred_fallthru
          _
        // Predicated region
        $region33: #{tpu_custom_call.1} parent=11 // pred_check
          %p306 = pneg %p175
        $region34: #{tpu_custom_call.1} parent=11 // pred_check_branch
          %308 = sbr.rel (%p306) target = $region36
        $region35: #{tpu_custom_call.1} parent=11 // pred_region
          _
        $region36: #{tpu_custom_call.1} parent=11 // pred_fallthru
          _
        // Predicated region
        $region37: #{tpu_custom_call.1} parent=11 // pred_check
          %p309 = pneg %p196
        $region38: #{tpu_custom_call.1} parent=11 // pred_check_branch
          %311 = sbr.rel (%p309) target = $region40
        $region39: #{tpu_custom_call.1} parent=11 // pred_region
          %313 = vsyncadd [#allocation9], 0
          %s314 = sshll.u32 %s7, 4
          %s315 = int_to_ptr.hbm [resolvable:$true] %s314
          %s316 = sshll.u32 [#allocation10], 4
          %s317 = int_to_ptr.vmem [resolvable:$true] %s316
          %322 = dma.hbm_to_vmem [thread:$0]  %s315, 1024, %s317, [#allocation9], 64, 64, 4
        $region40: #{tpu_custom_call.1} parent=11 // pred_fallthru
          _
        // Predicated region
        $region41: #{tpu_custom_call.1} parent=11 // pred_check
          %p323 = pneg %p217
        $region42: #{tpu_custom_call.1} parent=11 // pred_check_branch
          %325 = sbr.rel (%p323) target = $region44
        $region43: #{tpu_custom_call.1} parent=11 // pred_region
          _
        $region44: #{tpu_custom_call.1} parent=11 // pred_fallthru
          _
      $region12: #{tpu_custom_call.1} parent=5 // pred_fallthru
        _
      %p326 = scmp.lt.s32.totalorder %s23, 2
      // Predicated region
      $region45: #{tpu_custom_call.1} parent=5 // pred_check
        %p327 = pneg %p326
      $region46: #{tpu_custom_call.1} parent=5 // pred_check_branch
        %329 = sbr.rel (%p327) target = $region48
      $region47: #{tpu_custom_call.1} parent=5 // pred_region
        // Predicated region
        $region49: #{tpu_custom_call.1} parent=47 // pred_check
          %p330 = pneg %p43
        $region50: #{tpu_custom_call.1} parent=47 // pred_check_branch
          %332 = sbr.rel (%p330) target = $region52
        $region51: #{tpu_custom_call.1} parent=47 // pred_region
          %s333 = sand.u32 %s33, 1
          %s334 = scalar_lea.sflag [#allocation3], %s333
          %s335 = sand.u32 %s33, 1
          %s336 = smul.addr %s335, 16
          %s337 = scalar_lea.vmem [#allocation2], %s336
          %s338 = smul.u32 2, %s23
          %340 = vsyncadd %s334, 0
          %s341 = smul.addr %s338, 8
          %s342 = scalar_lea.hbm %s0, %s341
          %s343 = sshll.u32 %s342, 4
          %s344 = int_to_ptr.hbm [resolvable:$true] %s343
          %s345 = sshll.u32 %s337, 4
          %s346 = int_to_ptr.vmem [resolvable:$true] %s345
          %351 = dma.hbm_to_vmem [thread:$0]  %s344, 256, %s346, %s334, 128, 128, 8
        $region52: #{tpu_custom_call.1} parent=47 // pred_fallthru
          _
      $region48: #{tpu_custom_call.1} parent=5 // pred_fallthru
        _
      %p352 = scmp.le.s32.totalorder 1, %s23
      %p353 = scmp.lt.s32.totalorder %s23, 3
      %p354 = pnand %p352, %p353
      %p355 = pneg %p354
      // Predicated region
      $region53: #{tpu_custom_call.1} parent=5 // pred_check
        _
      $region54: #{tpu_custom_call.1} parent=5 // pred_check_branch
        %357 = sbr.rel (%p354) target = $region56
      $region55: #{tpu_custom_call.1} parent=5 // pred_region
        %s358 = ssub.s32 %s23, 1
        %s359 = sand.u32 %s36, 1
        %s360 = scalar_lea.sflag [#allocation3], %s359
        %s361 = sand.u32 %s36, 1
        %s362 = smul.addr %s361, 16
        %s363 = scalar_lea.vmem [#allocation2], %s362
        // Predicated region
        $region57: #{tpu_custom_call.1} parent=55 // pred_check
          %p364 = pneg %p49
        $region58: #{tpu_custom_call.1} parent=55 // pred_check_branch
          %366 = sbr.rel (%p364) target = $region60
        $region59: #{tpu_custom_call.1} parent=55 // pred_region
          %368 = dma.done %s360, 256
        $region60: #{tpu_custom_call.1} parent=55 // pred_fallthru
          _
        // Predicated region
        $region61: #{tpu_custom_call.1} parent=55 // pred_check
          %p369 = pneg %p70
        $region62: #{tpu_custom_call.1} parent=55 // pred_check_branch
          %371 = sbr.rel (%p369) target = $region64
        $region63: #{tpu_custom_call.1} parent=55 // pred_region
          %373 = dma.done [#allocation6], 256
        $region64: #{tpu_custom_call.1} parent=55 // pred_fallthru
          _
        // Predicated region
        $region65: #{tpu_custom_call.1} parent=55 // pred_check
          %p374 = pneg %p112
        $region66: #{tpu_custom_call.1} parent=55 // pred_check_branch
          %376 = sbr.rel (%p374) target = $region68
        $region67: #{tpu_custom_call.1} parent=55 // pred_region
          %378 = dma.done [#allocation6], 1024
        $region68: #{tpu_custom_call.1} parent=55 // pred_fallthru
          _
        // Predicated region
        $region69: #{tpu_custom_call.1} parent=55 // pred_check
          %p379 = pneg %p154
        $region70: #{tpu_custom_call.1} parent=55 // pred_check_branch
          %381 = sbr.rel (%p379) target = $region72
        $region71: #{tpu_custom_call.1} parent=55 // pred_region
          %383 = dma.done [#allocation9], 1024
        $region72: #{tpu_custom_call.1} parent=55 // pred_fallthru
          _
        // Predicated region
        $region73: #{tpu_custom_call.1} parent=55 // pred_check
          %p384 = pneg %p196
        $region74: #{tpu_custom_call.1} parent=55 // pred_check_branch
          %386 = sbr.rel (%p384) target = $region76
        $region75: #{tpu_custom_call.1} parent=55 // pred_region
          %388 = dma.done [#allocation9], 1024
        $region76: #{tpu_custom_call.1} parent=55 // pred_fallthru
          _
        %s389 = sand.u32 %s36, 1
        %s390 = scalar_lea.sflag [#allocation3], %s389
        %s391 = sand.u32 %s36, 1
        %s392 = smul.addr %s391, 16
        %s393 = scalar_lea.vmem [#allocation2], %s392
        %p394 = pneg %p49
        %p395 = pneg %p46
        %p396 = pneg %p70
        %p397 = pneg %p67
        %p398 = pneg %p91
        %p399 = pneg %p88
        %p400 = pneg %p112
        %p401 = pneg %p109
        %p402 = pneg %p133
        %p403 = pneg %p130
        %p404 = pneg %p154
        %p405 = pneg %p151
        %p406 = pneg %p175
        %p407 = pneg %p172
        %p408 = pneg %p196
        %p409 = pneg %p193
        %p410 = pneg %p217
        %p411 = pneg %p214
        %p412 = pneg %p243
        %p413 = pneg %p240
        %s414 = sand.u32 %s230, 1
        %s415 = scalar_lea.sflag [#allocation4], %s414
        %s416 = sand.u32 %s230, 1
        %s417 = smul.addr %s416, 16
        %s418 = scalar_lea.vmem [#allocation11], %s417
        %s419 = smul.u32 2, %s28
        %s420 = smul.u32 2, %s28
        %v422 = vld [vmem:[%s363] sm:$0xff]
        %v423 = vld [vmem:[%s363 + $0x8] sm:$0xff]
        %v424 = vpack.c.bf16 %v423, %v422
        %v425 = vld [vmem:[#allocation5] sm:$0xf]
        %v426 = vld [vmem:[#allocation5 + $0x4] sm:$0xf]
        %v427 = vld [vmem:[#allocation5 + $0x8] sm:$0xf]
        %v428 = vld [vmem:[#allocation5 + $0xc] sm:$0xf]
        %v429 = vld [vmem:[%s2] sm:$0x1]
        %v431 = vperm.slane %v429, 0
        %v437 = vunpack.c.l.b16 %v425
        %v438 = vunpack.c.l.b16 %v426
        %v439 = vunpack.c.l.b16 %v427
        %v440 = vunpack.c.l.b16 %v428
        %v441 = vpack.c.b16 %v438, %v437
        %v442 = vpack.c.b16 %v440, %v439
        %vm445 = vcmask 261120
        %v447 = vsel %vm445, %v424, 0
        %449 = vmatpush.bf16.msra.mxu0 0
        %450 = vmatpush.bf16.msra.mxu0 0
        %451 = vmatpush.bf16.msra.mxu0 0
        %452 = vmatpush.bf16.msra.mxu0 0
        %453 = vmatpush.bf16.msra.mxu0 0
        %454 = vmatpush.bf16.msra.mxu0 0
        %455 = vmatpush.bf16.msra.mxu0 %v442
        %456 = vmatpush.bf16.msra.mxu0 %v441
        %457 = vmatmul.bf16.gmra.mxu0 %v447
        %v458 = vpop.f32.mrf.mxu0
        %v459 = vadd.f32 %v431, %v458
        %v460 = vpop.f32.mrf.mxu0
        %v461 = vadd.f32 %v431, %v460
        %462 = vdwg.mxu0
        %v463 = vmax.f32 %v459, 0.0
        %v464 = vmax.f32 %v461, 0.0
        %v465 = vpack.c.bf16 %v464, %v463
        %v466 = vld [vmem:[#allocation7] sm:$0xf]
        %v467 = vld [vmem:[#allocation7 + $0x4] sm:$0xf]
        %v468 = vld [vmem:[#allocation7 + $0x8] sm:$0xf]
        %v469 = vld [vmem:[#allocation7 + $0xc] sm:$0xf]
        %v470 = vld [vmem:[#allocation7 + $0x10] sm:$0xf]
        %v471 = vld [vmem:[#allocation7 + $0x14] sm:$0xf]
        %v472 = vld [vmem:[#allocation7 + $0x18] sm:$0xf]
        %v473 = vld [vmem:[#allocation7 + $0x1c] sm:$0xf]
        %v474 = vld [vmem:[#allocation7 + $0x20] sm:$0xf]
        %v475 = vld [vmem:[#allocation7 + $0x24] sm:$0xf]
        %v476 = vld [vmem:[#allocation7 + $0x28] sm:$0xf]
        %v477 = vld [vmem:[#allocation7 + $0x2c] sm:$0xf]
        %v478 = vld [vmem:[#allocation7 + $0x30] sm:$0xf]
        %v479 = vld [vmem:[#allocation7 + $0x34] sm:$0xf]
        %v480 = vld [vmem:[#allocation7 + $0x38] sm:$0xf]
        %v481 = vld [vmem:[#allocation7 + $0x3c] sm:$0xf]
        %v482 = vld [vmem:[%s4] sm:$0x1]
        %v484 = vperm.slane %v482, 0
        %v502 = vunpack.c.l.b16 %v466
        %v503 = vunpack.c.l.b16 %v467
        %v504 = vunpack.c.l.b16 %v468
        %v505 = vunpack.c.l.b16 %v469
        %v506 = vunpack.c.l.b16 %v470
        %v507 = vunpack.c.l.b16 %v471
        %v508 = vunpack.c.l.b16 %v472
        %v509 = vunpack.c.l.b16 %v473
        %v510 = vunpack.c.l.b16 %v474
        %v511 = vunpack.c.l.b16 %v475
        %v512 = vunpack.c.l.b16 %v476
        %v513 = vunpack.c.l.b16 %v477
        %v514 = vunpack.c.l.b16 %v478
        %v515 = vunpack.c.l.b16 %v479
        %v516 = vunpack.c.l.b16 %v480
        %v517 = vunpack.c.l.b16 %v481
        %v518 = vpack.c.b16 %v503, %v502
        %v519 = vpack.c.b16 %v505, %v504
        %v520 = vpack.c.b16 %v507, %v506
        %v521 = vpack.c.b16 %v509, %v508
        %v522 = vpack.c.b16 %v511, %v510
        %v523 = vpack.c.b16 %v513, %v512
        %v524 = vpack.c.b16 %v515, %v514
        %v525 = vpack.c.b16 %v517, %v516
        %534 = vmatpush.bf16.msra.mxu0 %v525
        %535 = vmatpush.bf16.msra.mxu0 %v524
        %536 = vmatpush.bf16.msra.mxu0 %v523
        %537 = vmatpush.bf16.msra.mxu0 %v522
        %538 = vmatpush.bf16.msra.mxu0 %v521
        %539 = vmatpush.bf16.msra.mxu0 %v520
        %540 = vmatpush.bf16.msra.mxu0 %v519
        %541 = vmatpush.bf16.msra.mxu0 %v518
        %542 = vmatmul.bf16.gmra.mxu0 %v465
        %v543 = vpop.f32.mrf.mxu0
        %v544 = vadd.f32 %v484, %v543
        %v545 = vpop.f32.mrf.mxu0
        %v546 = vadd.f32 %v484, %v545
        %547 = vdwg.mxu0
        %v548 = vmax.f32 %v544, 0.0
        %v549 = vmax.f32 %v546, 0.0
        %v550 = vpack.c.bf16 %v549, %v548
        %v551 = vld [vmem:[#allocation8] sm:$0xf]
        %v552 = vld [vmem:[#allocation8 + $0x4] sm:$0xf]
        %v553 = vld [vmem:[#allocation8 + $0x8] sm:$0xf]
        %v554 = vld [vmem:[#allocation8 + $0xc] sm:$0xf]
        %v555 = vld [vmem:[#allocation8 + $0x10] sm:$0xf]
        %v556 = vld [vmem:[#allocation8 + $0x14] sm:$0xf]
        %v557 = vld [vmem:[#allocation8 + $0x18] sm:$0xf]
        %v558 = vld [vmem:[#allocation8 + $0x1c] sm:$0xf]
        %v559 = vld [vmem:[#allocation8 + $0x20] sm:$0xf]
        %v560 = vld [vmem:[#allocation8 + $0x24] sm:$0xf]
        %v561 = vld [vmem:[#allocation8 + $0x28] sm:$0xf]
        %v562 = vld [vmem:[#allocation8 + $0x2c] sm:$0xf]
        %v563 = vld [vmem:[#allocation8 + $0x30] sm:$0xf]
        %v564 = vld [vmem:[#allocation8 + $0x34] sm:$0xf]
        %v565 = vld [vmem:[#allocation8 + $0x38] sm:$0xf]
        %v566 = vld [vmem:[#allocation8 + $0x3c] sm:$0xf]
        %v567 = vld [vmem:[%s6] sm:$0x1]
        %v569 = vperm.slane %v567, 0
        %v587 = vunpack.c.l.b16 %v551
        %v588 = vunpack.c.l.b16 %v552
        %v589 = vunpack.c.l.b16 %v553
        %v590 = vunpack.c.l.b16 %v554
        %v591 = vunpack.c.l.b16 %v555
        %v592 = vunpack.c.l.b16 %v556
        %v593 = vunpack.c.l.b16 %v557
        %v594 = vunpack.c.l.b16 %v558
        %v595 = vunpack.c.l.b16 %v559
        %v596 = vunpack.c.l.b16 %v560
        %v597 = vunpack.c.l.b16 %v561
        %v598 = vunpack.c.l.b16 %v562
        %v599 = vunpack.c.l.b16 %v563
        %v600 = vunpack.c.l.b16 %v564
        %v601 = vunpack.c.l.b16 %v565
        %v602 = vunpack.c.l.b16 %v566
        %v603 = vpack.c.b16 %v588, %v587
        %v604 = vpack.c.b16 %v590, %v589
        %v605 = vpack.c.b16 %v592, %v591
        %v606 = vpack.c.b16 %v594, %v593
        %v607 = vpack.c.b16 %v596, %v595
        %v608 = vpack.c.b16 %v598, %v597
        %v609 = vpack.c.b16 %v600, %v599
        %v610 = vpack.c.b16 %v602, %v601
        %619 = vmatpush.bf16.msra.mxu0 %v610
        %620 = vmatpush.bf16.msra.mxu0 %v609
        %621 = vmatpush.bf16.msra.mxu0 %v608
        %622 = vmatpush.bf16.msra.mxu0 %v607
        %623 = vmatpush.bf16.msra.mxu0 %v606
        %624 = vmatpush.bf16.msra.mxu0 %v605
        %625 = vmatpush.bf16.msra.mxu0 %v604
        %626 = vmatpush.bf16.msra.mxu0 %v603
        %627 = vmatmul.bf16.gmra.mxu0 %v550
        %v628 = vpop.f32.mrf.mxu0
        %v629 = vadd.f32 %v569, %v628
        %v630 = vpop.f32.mrf.mxu0
        %v631 = vadd.f32 %v569, %v630
        %632 = vdwg.mxu0
        %v633 = vsub.f32 0.0, %v629
        %v634 = vsub.f32 0.0, %v631
        %v635 = vmul.f32 %v633, 1.442695
        %v636 = vpow.pop %v635
        %v637 = vmul.f32 %v634, 1.442695
        %v638 = vpow.pop %v637
        %v639 = vadd.f32 %v636, 1.0
        %v640 = vadd.f32 %v638, 1.0
        %v641 = vrcp.pop %v639
        %v642 = vrcp.pop %v640
        %v643 = vmul.f32 %v463, %v641
        %v644 = vmul.f32 %v464, %v642
        %v645 = vpack.c.bf16 %v644, %v643
        %v646 = vld [vmem:[#allocation10] sm:$0xf]
        %v647 = vld [vmem:[#allocation10 + $0x4] sm:$0xf]
        %v648 = vld [vmem:[#allocation10 + $0x8] sm:$0xf]
        %v649 = vld [vmem:[#allocation10 + $0xc] sm:$0xf]
        %v650 = vld [vmem:[#allocation10 + $0x10] sm:$0xf]
        %v651 = vld [vmem:[#allocation10 + $0x14] sm:$0xf]
        %v652 = vld [vmem:[#allocation10 + $0x18] sm:$0xf]
        %v653 = vld [vmem:[#allocation10 + $0x1c] sm:$0xf]
        %v654 = vld [vmem:[#allocation10 + $0x20] sm:$0xf]
        %v655 = vld [vmem:[#allocation10 + $0x24] sm:$0xf]
        %v656 = vld [vmem:[#allocation10 + $0x28] sm:$0xf]
        %v657 = vld [vmem:[#allocation10 + $0x2c] sm:$0xf]
        %v658 = vld [vmem:[#allocation10 + $0x30] sm:$0xf]
        %v659 = vld [vmem:[#allocation10 + $0x34] sm:$0xf]
        %v660 = vld [vmem:[#allocation10 + $0x38] sm:$0xf]
        %v661 = vld [vmem:[#allocation10 + $0x3c] sm:$0xf]
        %v662 = vld [vmem:[%s8] sm:$0x1]
        %v664 = vperm.slane %v662, 0
        %v682 = vunpack.c.l.b16 %v646
        %v683 = vunpack.c.l.b16 %v647
        %v684 = vunpack.c.l.b16 %v648
        %v685 = vunpack.c.l.b16 %v649
        %v686 = vunpack.c.l.b16 %v650
        %v687 = vunpack.c.l.b16 %v651
        %v688 = vunpack.c.l.b16 %v652
        %v689 = vunpack.c.l.b16 %v653
        %v690 = vunpack.c.l.b16 %v654
        %v691 = vunpack.c.l.b16 %v655
        %v692 = vunpack.c.l.b16 %v656
        %v693 = vunpack.c.l.b16 %v657
        %v694 = vunpack.c.l.b16 %v658
        %v695 = vunpack.c.l.b16 %v659
        %v696 = vunpack.c.l.b16 %v660
        %v697 = vunpack.c.l.b16 %v661
        %v698 = vpack.c.b16 %v683, %v682
        %v699 = vpack.c.b16 %v685, %v684
        %v700 = vpack.c.b16 %v687, %v686
        %v701 = vpack.c.b16 %v689, %v688
        %v702 = vpack.c.b16 %v691, %v690
        %v703 = vpack.c.b16 %v693, %v692
        %v704 = vpack.c.b16 %v695, %v694
        %v705 = vpack.c.b16 %v697, %v696
        %714 = vmatpush.bf16.msra.mxu0 %v705
        %715 = vmatpush.bf16.msra.mxu0 %v704
        %716 = vmatpush.bf16.msra.mxu0 %v703
        %717 = vmatpush.bf16.msra.mxu0 %v702
        %718 = vmatpush.bf16.msra.mxu0 %v701
        %719 = vmatpush.bf16.msra.mxu0 %v700
        %720 = vmatpush.bf16.msra.mxu0 %v699
        %721 = vmatpush.bf16.msra.mxu0 %v698
        %722 = vmatmul.bf16.gmra.mxu0 %v645
        %v723 = vpop.f32.mrf.mxu0
        %v724 = vadd.f32 %v664, %v723
        %v725 = vpop.f32.mrf.mxu0
        %v726 = vadd.f32 %v664, %v725
        %727 = vdwg.mxu0
        %728 = vst [vmem:[%s418] sm:$0xff] %v724
        %729 = vst [vmem:[%s418 + $0x8] sm:$0xff] %v726
        %s730 = sand.u32 %s230, 1
        %s731 = scalar_lea.sflag [#allocation4], %s730
        %s732 = sand.u32 %s230, 1
        %s733 = smul.addr %s732, 16
        %s734 = scalar_lea.vmem [#allocation11], %s733
        // Predicated region
        $region77: #{tpu_custom_call.1} parent=55 // pred_check
          %p735 = pneg %p240
        $region78: #{tpu_custom_call.1} parent=55 // pred_check_branch
          %737 = sbr.rel (%p735) target = $region80
        $region79: #{tpu_custom_call.1} parent=55 // pred_region
          %s738 = smul.u32 2, %s28
          %740 = vsyncadd %s731, 0
          %s741 = smul.addr %s738, 8
          %s742 = scalar_lea.hbm %s9, %s741
          %s743 = sshll.u32 %s734, 4
          %s744 = int_to_ptr.vmem [resolvable:$true] %s743
          %s745 = sshll.u32 %s742, 4
          %s746 = int_to_ptr.hbm [resolvable:$true] %s745
          %751 = dma.vmem_to_hbm [thread:$0]  %s744, 256, %s746, %s731, 128, 128, 8
        $region80: #{tpu_custom_call.1} parent=55 // pred_fallthru
          _
      $region56: #{tpu_custom_call.1} parent=5 // pred_fallthru
        _
      %p752 = scmp.le.s32.totalorder 2, %s23
      // Predicated region
      $region81: #{tpu_custom_call.1} parent=5 // pred_check
        %p753 = pneg %p752
      $region82: #{tpu_custom_call.1} parent=5 // pred_check_branch
        %755 = sbr.rel (%p753) target = $region84
      $region83: #{tpu_custom_call.1} parent=5 // pred_region
        %s756 = ssub.s32 %s23, 2
        // Predicated region
        $region85: #{tpu_custom_call.1} parent=83 // pred_check
          %p757 = pneg %p246
        $region86: #{tpu_custom_call.1} parent=83 // pred_check_branch
          %759 = sbr.rel (%p757) target = $region88
        $region87: #{tpu_custom_call.1} parent=83 // pred_region
          %s760 = sand.u32 %s231, 1
          %s761 = scalar_lea.sflag [#allocation4], %s760
          %s762 = sand.u32 %s231, 1
          %s763 = smul.addr %s762, 16
          %s764 = scalar_lea.vmem [#allocation11], %s763
          %766 = dma.done %s761, 256
        $region88: #{tpu_custom_call.1} parent=83 // pred_fallthru
          _
      $region84: #{tpu_custom_call.1} parent=5 // pred_fallthru
        _
    $region6: #{tpu_custom_call.1} parent=1 // loop_footer
      %s27 = sadd.s32 1, %s23
    $region7: #{tpu_custom_call.1} parent=1 // loop_footer_branch
      %22 = sbr.rel target = $region3
    $region8: #{tpu_custom_call.1} parent=1 // loop_exit
      _
    %767 = vsyncpa [#allocation3], 1
    %s768 = scalar_lea.sflag [#allocation3], 1
    %769 = vsyncpa %s768, 1
    %770 = vsyncpa [#allocation6], 1
    %771 = vsyncpa [#allocation9], 1
    %772 = vsyncpa [#allocation4], 1
    %s773 = scalar_lea.sflag [#allocation4], 1
    %774 = vsyncpa %s773, 1

</llo_original>
